<compile_context>
chip_gen: v7x
topology: tpu7x:2x2x1
jax: 0.10.0
libtpu: 0.0.40
codegen_flags: <defaults>
</compile_context>

<pallas_src>
import jax
import jax.numpy as jnp
from jax.experimental import pallas as pl
from jax.experimental.pallas import tpu as pltpu


def _moe_kernel(x_ref, w1_ref, b1_ref, w2_ref, b2_ref, we_ref, be_ref,
                r_ref, s_ref, o_ref):
    x = x_ref[...]                                           # (TB, D) bf16

    # ---- gate: Linear -> ReLU -> Linear -> softmax (f32 elementwise) -------
    h = jnp.dot(x, w1_ref[...], preferred_element_type=jnp.float32)
    h = jnp.maximum(h + b1_ref[...], 0.0)                    # (TB, H) f32
    logits = jnp.dot(h.astype(jnp.bfloat16), w2_ref[...],
                     preferred_element_type=jnp.float32)
    logits = logits + b2_ref[...]                            # (TB, N) f32

    m = jnp.max(logits, axis=-1, keepdims=True)
    e = jnp.exp(logits - m)
    probs = e * pl.reciprocal(jnp.sum(e, axis=-1, keepdims=True), approx=True)

    # ---- fused experts: one lane-dense MXU matmul (TB,D)x(D,N*D) -----------
    eo = jnp.dot(x, we_ref[...], preferred_element_type=jnp.float32)
    eo = eo + be_ref[...]                                    # (TB, N*D) f32

    # ---- weighted combine without per-expert slices or reshapes ------------
    # probs (TB,N) @ R (N,N*D) -> lane-expanded probs (TB, N*D)
    probs_rep = jnp.dot(probs, r_ref[...], preferred_element_type=jnp.float32)
    weighted = eo * probs_rep                                # (TB, N*D) VPU
    # weighted (TB,N*D) @ S (N*D,D_pad) -> reduce over experts + lane-pad.
    o_ref[...] = jnp.dot(weighted, s_ref[...],
                         preferred_element_type=jnp.float32).astype(o_ref.dtype)


def unavowable_moe_forward(x, params, *, block_b=128):
    """MoE forward pass in one Pallas kernel.

    x: (B, D) float32
    params: dict with w1 (D,H), b1 (1,H), w2 (H,N), b2 (1,N),
            we (N,D,D), be (N,1,D)
    returns (B, D) float32
    """
    B, D = x.shape
    N = params["we"].shape[0]
    H = params["w1"].shape[1]

    # bf16 matmul operands (f32 accumulation in-kernel); f32 biases for VPU.
    xb = x.astype(jnp.bfloat16)
    w1 = params["w1"].astype(jnp.bfloat16)
    w2 = params["w2"].astype(jnp.bfloat16)
    b1 = params["b1"].astype(jnp.float32)
    b2 = params["b2"].astype(jnp.float32)

    # Fuse expert weights: we2d[k, n*D+d] = we[n, k, d]  -> (D, N*D)
    we2d = jnp.transpose(params["we"], (1, 0, 2)).reshape(D, N * D)
    we2d = we2d.astype(jnp.bfloat16)
    be2d = params["be"].reshape(1, N * D).astype(jnp.float32)

    # Lane-dense output width (multiple of 128).
    d_pad = ((D + 127) // 128) * 128
    nd = N * D

    # R[n, n*D+d] = 1 : lane-expansion of probs (one tiny exact MXU matmul).
    R = (jnp.arange(nd)[None, :] // D == jnp.arange(N)[:, None])
    R = R.astype(jnp.float32)
    # S[n*D+d, d] = 1 (d < D), zeros in pad columns: expert reduce + lane pad.
    S = (jnp.arange(nd)[:, None] % D == jnp.arange(d_pad)[None, :])
    S = S.astype(jnp.float32)

    tb = min(block_b, B)
    assert B % tb == 0, "batch must be divisible by the batch tile"
    grid = (B // tb,)

    const = lambda shape: pl.BlockSpec(shape, lambda i: (0,) * len(shape))

    flops = 2 * B * (D * H + H * N + D * nd + N * nd + nd * d_pad)
    bytes_accessed = (xb.size * 2 + B * d_pad * 4
                      + w1.size * 2 + w2.size * 2 + we2d.size * 2
                      + b1.size * 4 + b2.size * 4 + be2d.size * 4
                      + R.size * 4 + S.size * 4)

    out = pl.pallas_call(
        _moe_kernel,
        out_shape=jax.ShapeDtypeStruct((B, d_pad), jnp.float32),
        grid=grid,
        in_specs=[
            pl.BlockSpec((tb, D), lambda i: (i, 0)),   # x: tiled over batch
            const(w1.shape), const(b1.shape),          # gate layer 1
            const(w2.shape), const(b2.shape),          # gate layer 2
            const(we2d.shape), const(be2d.shape),      # fused experts
            const(R.shape), const(S.shape),            # combine matrices
        ],
        out_specs=pl.BlockSpec((tb, d_pad), lambda i: (i, 0)),
        compiler_params=pltpu.CompilerParams(
            dimension_semantics=("parallel",)),
        cost_estimate=pl.CostEstimate(
            flops=flops, transcendentals=B * N, bytes_accessed=bytes_accessed),
    )(xb, w1, b1, w2, b2, we2d, be2d, R, S)

    return out[:, :D]


def _reference_forward_matched(x, params):
    """Pure-JAX reference mirroring the kernel's bf16-matmul / f32-acc scheme."""
    N, D, _ = params["we"].shape
    xb = x.astype(jnp.bfloat16)
    w1 = params["w1"].astype(jnp.bfloat16)
    w2 = params["w2"].astype(jnp.bfloat16)
    h = jnp.dot(xb, w1, preferred_element_type=jnp.float32) + params["b1"]
    h = jnp.maximum(h, 0.0)
    logits = jnp.dot(h.astype(jnp.bfloat16), w2,
                     preferred_element_type=jnp.float32) + params["b2"]
    probs = jax.nn.softmax(logits, axis=-1)
    we2d = jnp.transpose(params["we"], (1, 0, 2)).reshape(D, N * D)
    eo = jnp.dot(xb, we2d.astype(jnp.bfloat16),
                 preferred_element_type=jnp.float32)
    eo = eo + params["be"].reshape(1, N * D)
    eo = eo.reshape(-1, N, D)
    return jnp.einsum("bn,bnd->bd", probs, eo)


def _reference_forward_f32(x, params):
    """Pure-f32 reference mirroring the PyTorch forward()."""
    h = jnp.maximum(x @ params["w1"] + params["b1"], 0.0)
    logits = h @ params["w2"] + params["b2"]
    probs = jax.nn.softmax(logits, axis=-1)
    expert_out = jnp.einsum("bd,nde->bne", x, params["we"]) + \
        params["be"].reshape(params["we"].shape[0], -1)[None]
    return jnp.einsum("bn,bnd->bd", probs, expert_out)


def init_params(key, dim, hidden_dim, num_experts):
    ks = jax.random.split(key, 6)
    scale = 0.02
    return {
        "w1": scale * jax.random.normal(ks[0], (dim, hidden_dim), jnp.float32),
        "b1": scale * jax.random.normal(ks[1], (1, hidden_dim), jnp.float32),
        "w2": scale * jax.random.normal(ks[2], (hidden_dim, num_experts), jnp.float32),
        "b2": scale * jax.random.normal(ks[3], (1, num_experts), jnp.float32),
        "we": scale * jax.random.normal(ks[4], (num_experts, dim, dim), jnp.float32),
        "be": scale * jax.random.normal(ks[5], (num_experts, 1, dim), jnp.float32),
    }


if __name__ == "__main__":
    # batch=256 (two 128-row MXU-shaped tiles over the parallel grid axis),
    # dim=32, hidden=32, 4 experts — small shapes, single fast compile.
    B, D, H, N = 256, 32, 32, 4

    key = jax.random.PRNGKey(0)
    kx, kp = jax.random.split(key)
    x = jax.random.normal(kx, (B, D), jnp.float32)
    params = init_params(kp, D, H, N)

    out = jax.block_until_ready(unavowable_moe_forward(x, params))
    assert out.shape == (B, D)
    assert bool(jnp.all(jnp.isfinite(out)))

    ref_m = _reference_forward_matched(x, params)
    ref_f = _reference_forward_f32(x, params)
    err_m = float(jnp.max(jnp.abs(out - ref_m)))
    err_f = float(jnp.max(jnp.abs(out - ref_f)))
    assert jnp.allclose(out, ref_m, atol=5e-3, rtol=5e-3), \
        f"bf16-matched max abs err {err_m}"
    assert jnp.allclose(out, ref_f, atol=3e-2, rtol=3e-2), \
        f"f32-reference max abs err {err_f}"

    # TODO(synk): disagreement_loss() (pairwise cosine-similarity penalty over
    # cached expert outputs) is a training-time auxiliary, not part of forward().
    print("KERNEL_OK")
</pallas_src>

<mosaic_0001>
module attributes {stable_mosaic.version = 11 : i64} {
  func.func @_moe_kernel(%arg0: i32, %arg1: memref<128x32xbf16, #tpu.memory_space<vmem>>, %arg2: memref<32x32xbf16, #tpu.memory_space<vmem>>, %arg3: memref<1x32xf32, #tpu.memory_space<vmem>>, %arg4: memref<32x4xbf16, #tpu.memory_space<vmem>>, %arg5: memref<1x4xf32, #tpu.memory_space<vmem>>, %arg6: memref<32x128xbf16, #tpu.memory_space<vmem>>, %arg7: memref<1x128xf32, #tpu.memory_space<vmem>>, %arg8: memref<4x128xf32, #tpu.memory_space<vmem>>, %arg9: memref<128x128xf32, #tpu.memory_space<vmem>>, %arg10: memref<128x128xf32, #tpu.memory_space<vmem>>) attributes {dimension_semantics = [#tpu.dimension_semantics<parallel>], iteration_bounds = array<i64: 2>, scalar_prefetch = 0 : i64, scratch_operands = 0 : i64, tpu.core_type = #tpu.core_type<tc>, window_params = [{transform_indices = @transform_0, window_bounds = array<i64: 128, 32>}, {pipeline_mode = #tpu.pipeline_mode<synchronous>, transform_indices = @transform_1, window_bounds = array<i64: 32, 32>}, {pipeline_mode = #tpu.pipeline_mode<synchronous>, transform_indices = @transform_2, window_bounds = array<i64: 1, 32>}, {pipeline_mode = #tpu.pipeline_mode<synchronous>, transform_indices = @transform_3, window_bounds = array<i64: 32, 4>}, {pipeline_mode = #tpu.pipeline_mode<synchronous>, transform_indices = @transform_4, window_bounds = array<i64: 1, 4>}, {pipeline_mode = #tpu.pipeline_mode<synchronous>, transform_indices = @transform_5, window_bounds = array<i64: 32, 128>}, {pipeline_mode = #tpu.pipeline_mode<synchronous>, transform_indices = @transform_6, window_bounds = array<i64: 1, 128>}, {pipeline_mode = #tpu.pipeline_mode<synchronous>, transform_indices = @transform_7, window_bounds = array<i64: 4, 128>}, {pipeline_mode = #tpu.pipeline_mode<synchronous>, transform_indices = @transform_8, window_bounds = array<i64: 128, 128>}, {transform_indices = @transform_9, window_bounds = array<i64: 128, 128>}]} {
    %c0 = arith.constant 0 : index
    %c0_0 = arith.constant 0 : index
    %0 = vector.load %arg1[%c0, %c0_0] : memref<128x32xbf16, #tpu.memory_space<vmem>>, vector<128x32xbf16>
    %c0_1 = arith.constant 0 : index
    %c0_2 = arith.constant 0 : index
    %1 = vector.load %arg2[%c0_1, %c0_2] : memref<32x32xbf16, #tpu.memory_space<vmem>>, vector<32x32xbf16>
    %cst = arith.constant dense<0.000000e+00> : vector<128x32xf32>
    %2 = tpu.matmul %0, %1, %cst {dimension_numbers = #tpu.dot_dimension_numbers<[1], [0], [0], [1], [0, 0, 1, 1], [], []>} : vector<128x32xbf16>, vector<32x32xbf16>, vector<128x32xf32> -> vector<128x32xf32>
    %c0_3 = arith.constant 0 : index
    %c0_4 = arith.constant 0 : index
    %3 = vector.load %arg3[%c0_3, %c0_4] : memref<1x32xf32, #tpu.memory_space<vmem>>, vector<1x32xf32>
    %4 = vector.broadcast %3 : vector<1x32xf32> to vector<128x32xf32>
    %5 = arith.addf %2, %4 : vector<128x32xf32>
    %cst_5 = arith.constant 0.000000e+00 : f32
    %6 = vector.broadcast %cst_5 : f32 to vector<128x32xf32>
    %7 = arith.maximumf %5, %6 : vector<128x32xf32>
    %8 = arith.truncf %7 : vector<128x32xf32> to vector<128x32xbf16>
    %c0_6 = arith.constant 0 : index
    %c0_7 = arith.constant 0 : index
    %9 = vector.load %arg4[%c0_6, %c0_7] : memref<32x4xbf16, #tpu.memory_space<vmem>>, vector<32x4xbf16>
    %cst_8 = arith.constant dense<0.000000e+00> : vector<128x4xf32>
    %10 = tpu.matmul %8, %9, %cst_8 {dimension_numbers = #tpu.dot_dimension_numbers<[1], [0], [0], [1], [0, 0, 1, 1], [], []>} : vector<128x32xbf16>, vector<32x4xbf16>, vector<128x4xf32> -> vector<128x4xf32>
    %c0_9 = arith.constant 0 : index
    %c0_10 = arith.constant 0 : index
    %11 = vector.load %arg5[%c0_9, %c0_10] : memref<1x4xf32, #tpu.memory_space<vmem>>, vector<1x4xf32>
    %12 = vector.broadcast %11 : vector<1x4xf32> to vector<128x4xf32>
    %13 = arith.addf %10, %12 : vector<128x4xf32>
    %cst_11 = arith.constant dense<0xFF800000> : vector<128xf32>
    %14 = vector.multi_reduction <maximumf>, %13, %cst_11 [1] : vector<128x4xf32> to vector<128xf32>
    %15 = vector.shape_cast %14 : vector<128xf32> to vector<128x1xf32>
    %16 = vector.broadcast %15 : vector<128x1xf32> to vector<128x4xf32>
    %17 = arith.subf %13, %16 : vector<128x4xf32>
    %18 = math.exp %17 : vector<128x4xf32>
    %cst_12 = arith.constant dense<0.000000e+00> : vector<128xf32>
    %19 = vector.multi_reduction <add>, %18, %cst_12 [1] : vector<128x4xf32> to vector<128xf32>
    %20 = vector.shape_cast %19 : vector<128xf32> to vector<128x1xf32>
    %21 = tpu.reciprocal %20 {approx = true} : vector<128x1xf32> -> vector<128x1xf32>
    %22 = vector.broadcast %21 : vector<128x1xf32> to vector<128x4xf32>
    %23 = arith.mulf %18, %22 : vector<128x4xf32>
    %c0_13 = arith.constant 0 : index
    %c0_14 = arith.constant 0 : index
    %24 = vector.load %arg6[%c0_13, %c0_14] : memref<32x128xbf16, #tpu.memory_space<vmem>>, vector<32x128xbf16>
    %cst_15 = arith.constant dense<0.000000e+00> : vector<128x128xf32>
    %25 = tpu.matmul %0, %24, %cst_15 {dimension_numbers = #tpu.dot_dimension_numbers<[1], [0], [0], [1], [0, 0, 1, 1], [], []>} : vector<128x32xbf16>, vector<32x128xbf16>, vector<128x128xf32> -> vector<128x128xf32>
    %c0_16 = arith.constant 0 : index
    %c0_17 = arith.constant 0 : index
    %26 = vector.load %arg7[%c0_16, %c0_17] : memref<1x128xf32, #tpu.memory_space<vmem>>, vector<1x128xf32>
    %27 = vector.broadcast %26 : vector<1x128xf32> to vector<128x128xf32>
    %28 = arith.addf %25, %27 : vector<128x128xf32>
    %c0_18 = arith.constant 0 : index
    %c0_19 = arith.constant 0 : index
    %29 = vector.load %arg8[%c0_18, %c0_19] : memref<4x128xf32, #tpu.memory_space<vmem>>, vector<4x128xf32>
    %cst_20 = arith.constant dense<0.000000e+00> : vector<128x128xf32>
    %30 = tpu.matmul %23, %29, %cst_20 {dimension_numbers = #tpu.dot_dimension_numbers<[1], [0], [0], [1], [0, 0, 1, 1], [], []>} : vector<128x4xf32>, vector<4x128xf32>, vector<128x128xf32> -> vector<128x128xf32>
    %31 = arith.mulf %28, %30 : vector<128x128xf32>
    %c0_21 = arith.constant 0 : index
    %c0_22 = arith.constant 0 : index
    %32 = vector.load %arg9[%c0_21, %c0_22] : memref<128x128xf32, #tpu.memory_space<vmem>>, vector<128x128xf32>
    %cst_23 = arith.constant dense<0.000000e+00> : vector<128x128xf32>
    %33 = tpu.matmul %31, %32, %cst_23 {dimension_numbers = #tpu.dot_dimension_numbers<[1], [0], [0], [1], [0, 0, 1, 1], [], []>} : vector<128x128xf32>, vector<128x128xf32>, vector<128x128xf32> -> vector<128x128xf32>
    %c0_24 = arith.constant 0 : index
    %c0_25 = arith.constant 0 : index
    %34 = vector.load %arg10[%c0_24, %c0_25] : memref<128x128xf32, #tpu.memory_space<vmem>>, vector<128x128xf32>
    tpu.vector_store %arg10[%c0_24, %c0_25], %33 {strides = array<i32>} : memref<128x128xf32, #tpu.memory_space<vmem>>, vector<128x128xf32>,
    return
  }
  func.func @transform_0(%arg0: i32) -> (i32, i32) {
    %c0_i32 = arith.constant 0 : i32
    %c0_i32_0 = arith.constant 0 : i32
    return %arg0, %c0_i32 : i32, i32
  }
  func.func @transform_1(%arg0: i32) -> (i32, i32) {
    %c0_i32 = arith.constant 0 : i32
    %c0_i32_0 = arith.constant 0 : i32
    %c0_i32_1 = arith.constant 0 : i32
    return %c0_i32, %c0_i32_0 : i32, i32
  }
  func.func @transform_2(%arg0: i32) -> (i32, i32) {
    %c0_i32 = arith.constant 0 : i32
    %c0_i32_0 = arith.constant 0 : i32
    %c0_i32_1 = arith.constant 0 : i32
    return %c0_i32, %c0_i32_0 : i32, i32
  }
  func.func @transform_3(%arg0: i32) -> (i32, i32) {
    %c0_i32 = arith.constant 0 : i32
    %c0_i32_0 = arith.constant 0 : i32
    %c0_i32_1 = arith.constant 0 : i32
    return %c0_i32, %c0_i32_0 : i32, i32
  }
  func.func @transform_4(%arg0: i32) -> (i32, i32) {
    %c0_i32 = arith.constant 0 : i32
    %c0_i32_0 = arith.constant 0 : i32
    %c0_i32_1 = arith.constant 0 : i32
    return %c0_i32, %c0_i32_0 : i32, i32
  }
  func.func @transform_5(%arg0: i32) -> (i32, i32) {
    %c0_i32 = arith.constant 0 : i32
    %c0_i32_0 = arith.constant 0 : i32
    %c0_i32_1 = arith.constant 0 : i32
    return %c0_i32, %c0_i32_0 : i32, i32
  }
  func.func @transform_6(%arg0: i32) -> (i32, i32) {
    %c0_i32 = arith.constant 0 : i32
    %c0_i32_0 = arith.constant 0 : i32
    %c0_i32_1 = arith.constant 0 : i32
    return %c0_i32, %c0_i32_0 : i32, i32
  }
  func.func @transform_7(%arg0: i32) -> (i32, i32) {
    %c0_i32 = arith.constant 0 : i32
    %c0_i32_0 = arith.constant 0 : i32
    %c0_i32_1 = arith.constant 0 : i32
    return %c0_i32, %c0_i32_0 : i32, i32
  }
  func.func @transform_8(%arg0: i32) -> (i32, i32) {
    %c0_i32 = arith.constant 0 : i32
    %c0_i32_0 = arith.constant 0 : i32
    %c0_i32_1 = arith.constant 0 : i32
    return %c0_i32, %c0_i32_0 : i32, i32
  }
  func.func @transform_9(%arg0: i32) -> (i32, i32) {
    %c0_i32 = arith.constant 0 : i32
    %c0_i32_0 = arith.constant 0 : i32
    return %arg0, %c0_i32 : i32, i32
  }
}

</mosaic_0001>

<llo_original>
// kernel: tpu_custom_call.1
$region0: #{tpu_custom_call.1}
  #allocation0 [shape = 'u32[]', space=smem, size = 0x4, offset = 0x4, fixed_abs, tag = 'smem constant byte address 0x4 - core index']
  #allocation1 [shape = 'u32[144,128]{1,0:T(1,128)}', space=vmem, size = 0x12000, scoped, tag = 'internal scratch']
  %s0 = inlined_call_operand.vmem [shape: bf16[256,32], index: 0, kind: input, shape index: {}]
  %s1 = inlined_call_operand.vmem [shape: bf16[32,32], index: 1, kind: input, shape index: {}]
  %s2 = inlined_call_operand.vmem [shape: f32[1,32], index: 2, kind: input, shape index: {}]
  %s3 = inlined_call_operand.vmem [shape: bf16[32,4], index: 3, kind: input, shape index: {}]
  %s4 = inlined_call_operand.vmem [shape: f32[1,4], index: 4, kind: input, shape index: {}]
  %s5 = inlined_call_operand.vmem [shape: bf16[32,128], index: 5, kind: input, shape index: {}]
  %s6 = inlined_call_operand.vmem [shape: f32[1,128], index: 6, kind: input, shape index: {}]
  %s7 = inlined_call_operand.vmem [shape: f32[4,128], index: 7, kind: input, shape index: {}]
  %s8 = inlined_call_operand.vmem [shape: f32[128,128], index: 8, kind: input, shape index: {}]
  %s9 = inlined_call_operand.hbm [shape: f32[256,128], index: 9, kind: output, shape index: {}]
  %s10 = sld [smem:[#allocation0]]
  $region69: #{tpu_custom_call.1} parent=0
    _
  %s12 = ssub.s32 1, %s10
  %s13 = scalar_select 0, %s12, %s10
  $region1: #{tpu_custom_call.1} parent=0
    #allocation2 [shape = 'u8[131072]{0}', space=vmem, size = 0x20000, scoped, tag = 'output window, operand 0']
    #allocation3 [shape = 's32[2]{0}', space=sflag, size = 0x8, scoped, tag = 'scoped memory for tpu_custom_call.1']
    %14 = vsyncpa [#allocation3], 0
    %s15 = scalar_lea.sflag [#allocation3], 1
    %16 = vsyncpa %s15, 0
    loop: start=0, step=1, limit=4
    $region2: #{tpu_custom_call.1} parent=1 // loop_pre_header
      _
    $region3: #{tpu_custom_call.1} parent=1 // loop_header
      %s18 = sphi 0, %s22
      %p19 = scmp.ge.s32.totalorder %s18, 4
      %s28 = sphi 0, %s30
      %s31 = sphi 0, %s28
      %s32 = sphi 0, %s31
      %s48 = sphi 0, %s32
      %s52 = sphi 0, %s52
      %s54 = sphi 0, %s52
      %s55 = sphi 0, %s54
      %s69 = sphi 0, %s55
      %s73 = sphi 0, %s73
      %s75 = sphi 0, %s73
      %s76 = sphi 0, %s75
      %s90 = sphi 0, %s76
      %s94 = sphi 0, %s94
      %s96 = sphi 0, %s94
      %s97 = sphi 0, %s96
      %s111 = sphi 0, %s97
      %s115 = sphi 0, %s115
      %s117 = sphi 0, %s115
      %s118 = sphi 0, %s117
      %s132 = sphi 0, %s118
      %s136 = sphi 0, %s136
      %s138 = sphi 0, %s136
      %s139 = sphi 0, %s138
      %s153 = sphi 0, %s139
      %s157 = sphi 0, %s157
      %s159 = sphi 0, %s157
      %s160 = sphi 0, %s159
      %s174 = sphi 0, %s160
      %s178 = sphi 0, %s178
      %s180 = sphi 0, %s178
      %s181 = sphi 0, %s180
      %s195 = sphi 0, %s181
      %s199 = sphi 0, %s199
      %s201 = sphi 0, %s199
      %s202 = sphi 0, %s201
      %s216 = sphi 0, %s202
      %s222 = sphi 0, %s224
      %s225 = sphi 0, %s222
      %s226 = sphi 0, %s225
      %s242 = sphi 0, %s226
    $region4: #{tpu_custom_call.1} parent=1 // loop_header_branch
      %21 = sbr.rel (%p19) target = $region8
    $region5: #{tpu_custom_call.1} parent=1 // loop_body
      %s23 = ssub.s32 %s18, 1
      %s24 = ssub.s32 %s18, 2
      %s25 = sadd.s32 %s18, 1
      %s26 = ssub.s32 %s18, %s25
      %p27 = scmp.eq.s32.totalorder %s26, 0
      %s29 = sadd.s32 %s28, 1
      %s30 = scalar_select %p27, %s28, %s29
      %p33 = pneg %p27
      %p34 = scmp.eq.s32.totalorder %s18, 1
      %p35 = por %p33, %p34
      %p36 = scmp.ne.s32.totalorder %s28, %s31
      %p37 = scmp.eq.s32.totalorder %s18, 0
      %p38 = por %p36, %p37
      %p39 = scmp.ne.s32.totalorder %s28, %s31
      %p40 = scmp.eq.s32.totalorder %s23, 1
      %p41 = por %p39, %p40
      %p42 = scmp.ne.s32.totalorder %s31, %s32
      %p43 = scmp.eq.s32.totalorder %s23, 0
      %p44 = por %p42, %p43
      %p45 = scmp.ne.s32.totalorder %s31, %s32
      %p46 = scmp.eq.s32.totalorder %s24, 1
      %p47 = por %p45, %p46
      %p49 = scmp.ne.s32.totalorder %s32, %s48
      %p50 = scmp.eq.s32.totalorder %s24, 0
      %p51 = por %p49, %p50
      %s53 = sadd.s32 %s52, 1
      %p56 = scmp.eq.s32.totalorder %s18, 1
      %p57 = scmp.ne.s32.totalorder %s52, %s54
      %p58 = scmp.eq.s32.totalorder %s18, 0
      %p59 = por %p57, %p58
      %p60 = scmp.ne.s32.totalorder %s52, %s54
      %p61 = scmp.eq.s32.totalorder %s23, 1
      %p62 = por %p60, %p61
      %p63 = scmp.ne.s32.totalorder %s54, %s55
      %p64 = scmp.eq.s32.totalorder %s23, 0
      %p65 = por %p63, %p64
      %p66 = scmp.ne.s32.totalorder %s54, %s55
      %p67 = scmp.eq.s32.totalorder %s24, 1
      %p68 = por %p66, %p67
      %p70 = scmp.ne.s32.totalorder %s55, %s69
      %p71 = scmp.eq.s32.totalorder %s24, 0
      %p72 = por %p70, %p71
      %s74 = sadd.s32 %s73, 1
      %p77 = scmp.eq.s32.totalorder %s18, 1
      %p78 = scmp.ne.s32.totalorder %s73, %s75
      %p79 = scmp.eq.s32.totalorder %s18, 0
      %p80 = por %p78, %p79
      %p81 = scmp.ne.s32.totalorder %s73, %s75
      %p82 = scmp.eq.s32.totalorder %s23, 1
      %p83 = por %p81, %p82
      %p84 = scmp.ne.s32.totalorder %s75, %s76
      %p85 = scmp.eq.s32.totalorder %s23, 0
      %p86 = por %p84, %p85
      %p87 = scmp.ne.s32.totalorder %s75, %s76
      %p88 = scmp.eq.s32.totalorder %s24, 1
      %p89 = por %p87, %p88
      %p91 = scmp.ne.s32.totalorder %s76, %s90
      %p92 = scmp.eq.s32.totalorder %s24, 0
      %p93 = por %p91, %p92
      %s95 = sadd.s32 %s94, 1
      %p98 = scmp.eq.s32.totalorder %s18, 1
      %p99 = scmp.ne.s32.totalorder %s94, %s96
      %p100 = scmp.eq.s32.totalorder %s18, 0
      %p101 = por %p99, %p100
      %p102 = scmp.ne.s32.totalorder %s94, %s96
      %p103 = scmp.eq.s32.totalorder %s23, 1
      %p104 = por %p102, %p103
      %p105 = scmp.ne.s32.totalorder %s96, %s97
      %p106 = scmp.eq.s32.totalorder %s23, 0
      %p107 = por %p105, %p106
      %p108 = scmp.ne.s32.totalorder %s96, %s97
      %p109 = scmp.eq.s32.totalorder %s24, 1
      %p110 = por %p108, %p109
      %p112 = scmp.ne.s32.totalorder %s97, %s111
      %p113 = scmp.eq.s32.totalorder %s24, 0
      %p114 = por %p112, %p113
      %s116 = sadd.s32 %s115, 1
      %p119 = scmp.eq.s32.totalorder %s18, 1
      %p120 = scmp.ne.s32.totalorder %s115, %s117
      %p121 = scmp.eq.s32.totalorder %s18, 0
      %p122 = por %p120, %p121
      %p123 = scmp.ne.s32.totalorder %s115, %s117
      %p124 = scmp.eq.s32.totalorder %s23, 1
      %p125 = por %p123, %p124
      %p126 = scmp.ne.s32.totalorder %s117, %s118
      %p127 = scmp.eq.s32.totalorder %s23, 0
      %p128 = por %p126, %p127
      %p129 = scmp.ne.s32.totalorder %s117, %s118
      %p130 = scmp.eq.s32.totalorder %s24, 1
      %p131 = por %p129, %p130
      %p133 = scmp.ne.s32.totalorder %s118, %s132
      %p134 = scmp.eq.s32.totalorder %s24, 0
      %p135 = por %p133, %p134
      %s137 = sadd.s32 %s136, 1
      %p140 = scmp.eq.s32.totalorder %s18, 1
      %p141 = scmp.ne.s32.totalorder %s136, %s138
      %p142 = scmp.eq.s32.totalorder %s18, 0
      %p143 = por %p141, %p142
      %p144 = scmp.ne.s32.totalorder %s136, %s138
      %p145 = scmp.eq.s32.totalorder %s23, 1
      %p146 = por %p144, %p145
      %p147 = scmp.ne.s32.totalorder %s138, %s139
      %p148 = scmp.eq.s32.totalorder %s23, 0
      %p149 = por %p147, %p148
      %p150 = scmp.ne.s32.totalorder %s138, %s139
      %p151 = scmp.eq.s32.totalorder %s24, 1
      %p152 = por %p150, %p151
      %p154 = scmp.ne.s32.totalorder %s139, %s153
      %p155 = scmp.eq.s32.totalorder %s24, 0
      %p156 = por %p154, %p155
      %s158 = sadd.s32 %s157, 1
      %p161 = scmp.eq.s32.totalorder %s18, 1
      %p162 = scmp.ne.s32.totalorder %s157, %s159
      %p163 = scmp.eq.s32.totalorder %s18, 0
      %p164 = por %p162, %p163
      %p165 = scmp.ne.s32.totalorder %s157, %s159
      %p166 = scmp.eq.s32.totalorder %s23, 1
      %p167 = por %p165, %p166
      %p168 = scmp.ne.s32.totalorder %s159, %s160
      %p169 = scmp.eq.s32.totalorder %s23, 0
      %p170 = por %p168, %p169
      %p171 = scmp.ne.s32.totalorder %s159, %s160
      %p172 = scmp.eq.s32.totalorder %s24, 1
      %p173 = por %p171, %p172
      %p175 = scmp.ne.s32.totalorder %s160, %s174
      %p176 = scmp.eq.s32.totalorder %s24, 0
      %p177 = por %p175, %p176
      %s179 = sadd.s32 %s178, 1
      %p182 = scmp.eq.s32.totalorder %s18, 1
      %p183 = scmp.ne.s32.totalorder %s178, %s180
      %p184 = scmp.eq.s32.totalorder %s18, 0
      %p185 = por %p183, %p184
      %p186 = scmp.ne.s32.totalorder %s178, %s180
      %p187 = scmp.eq.s32.totalorder %s23, 1
      %p188 = por %p186, %p187
      %p189 = scmp.ne.s32.totalorder %s180, %s181
      %p190 = scmp.eq.s32.totalorder %s23, 0
      %p191 = por %p189, %p190
      %p192 = scmp.ne.s32.totalorder %s180, %s181
      %p193 = scmp.eq.s32.totalorder %s24, 1
      %p194 = por %p192, %p193
      %p196 = scmp.ne.s32.totalorder %s181, %s195
      %p197 = scmp.eq.s32.totalorder %s24, 0
      %p198 = por %p196, %p197
      %s200 = sadd.s32 %s199, 1
      %p203 = scmp.eq.s32.totalorder %s18, 1
      %p204 = scmp.ne.s32.totalorder %s199, %s201
      %p205 = scmp.eq.s32.totalorder %s18, 0
      %p206 = por %p204, %p205
      %p207 = scmp.ne.s32.totalorder %s199, %s201
      %p208 = scmp.eq.s32.totalorder %s23, 1
      %p209 = por %p207, %p208
      %p210 = scmp.ne.s32.totalorder %s201, %s202
      %p211 = scmp.eq.s32.totalorder %s23, 0
      %p212 = por %p210, %p211
      %p213 = scmp.ne.s32.totalorder %s201, %s202
      %p214 = scmp.eq.s32.totalorder %s24, 1
      %p215 = por %p213, %p214
      %p217 = scmp.ne.s32.totalorder %s202, %s216
      %p218 = scmp.eq.s32.totalorder %s24, 0
      %p219 = por %p217, %p218
      %s220 = ssub.s32 %s18, %s25
      %p221 = scmp.eq.s32.totalorder %s220, 0
      %s223 = sadd.s32 %s222, 1
      %s224 = scalar_select %p221, %s222, %s223
      %p227 = pneg %p221
      %p228 = scmp.eq.s32.totalorder %s18, 1
      %p229 = por %p227, %p228
      %p230 = scmp.ne.s32.totalorder %s222, %s225
      %p231 = scmp.eq.s32.totalorder %s18, 0
      %p232 = por %p230, %p231
      %p233 = scmp.ne.s32.totalorder %s222, %s225
      %p234 = scmp.eq.s32.totalorder %s23, 1
      %p235 = por %p233, %p234
      %p236 = scmp.ne.s32.totalorder %s225, %s226
      %p237 = scmp.eq.s32.totalorder %s23, 0
      %p238 = por %p236, %p237
      %p239 = scmp.ne.s32.totalorder %s225, %s226
      %p240 = scmp.eq.s32.totalorder %s24, 1
      %p241 = por %p239, %p240
      %p243 = scmp.ne.s32.totalorder %s226, %s242
      %p244 = scmp.eq.s32.totalorder %s24, 0
      %p245 = por %p243, %p244
      %p246 = scmp.le.s32.totalorder 1, %s18
      %p247 = scmp.lt.s32.totalorder %s18, 3
      %p248 = pnand %p246, %p247
      %p249 = pneg %p248
      // Predicated region
      $region9: #{tpu_custom_call.1} parent=5 // pred_check
        _
      $region10: #{tpu_custom_call.1} parent=5 // pred_check_branch
        %251 = sbr.rel (%p248) target = $region12
      $region11: #{tpu_custom_call.1} parent=5 // pred_region
        %s252 = ssub.s32 %s18, 1
        // Predicated region
        $region13: #{tpu_custom_call.1} parent=11 // pred_check
          %p253 = pneg %p65
        $region14: #{tpu_custom_call.1} parent=11 // pred_check_branch
          %255 = sbr.rel (%p253) target = $region16
        $region15: #{tpu_custom_call.1} parent=11 // pred_region
          _
        $region16: #{tpu_custom_call.1} parent=11 // pred_fallthru
          _
        // Predicated region
        $region17: #{tpu_custom_call.1} parent=11 // pred_check
          %p256 = pneg %p86
        $region18: #{tpu_custom_call.1} parent=11 // pred_check_branch
          %258 = sbr.rel (%p256) target = $region20
        $region19: #{tpu_custom_call.1} parent=11 // pred_region
          _
        $region20: #{tpu_custom_call.1} parent=11 // pred_fallthru
          _
        // Predicated region
        $region21: #{tpu_custom_call.1} parent=11 // pred_check
          %p259 = pneg %p107
        $region22: #{tpu_custom_call.1} parent=11 // pred_check_branch
          %261 = sbr.rel (%p259) target = $region24
        $region23: #{tpu_custom_call.1} parent=11 // pred_region
          _
        $region24: #{tpu_custom_call.1} parent=11 // pred_fallthru
          _
        // Predicated region
        $region25: #{tpu_custom_call.1} parent=11 // pred_check
          %p262 = pneg %p128
        $region26: #{tpu_custom_call.1} parent=11 // pred_check_branch
          %264 = sbr.rel (%p262) target = $region28
        $region27: #{tpu_custom_call.1} parent=11 // pred_region
          _
        $region28: #{tpu_custom_call.1} parent=11 // pred_fallthru
          _
        // Predicated region
        $region29: #{tpu_custom_call.1} parent=11 // pred_check
          %p265 = pneg %p149
        $region30: #{tpu_custom_call.1} parent=11 // pred_check_branch
          %267 = sbr.rel (%p265) target = $region32
        $region31: #{tpu_custom_call.1} parent=11 // pred_region
          _
        $region32: #{tpu_custom_call.1} parent=11 // pred_fallthru
          _
        // Predicated region
        $region33: #{tpu_custom_call.1} parent=11 // pred_check
          %p268 = pneg %p170
        $region34: #{tpu_custom_call.1} parent=11 // pred_check_branch
          %270 = sbr.rel (%p268) target = $region36
        $region35: #{tpu_custom_call.1} parent=11 // pred_region
          _
        $region36: #{tpu_custom_call.1} parent=11 // pred_fallthru
          _
        // Predicated region
        $region37: #{tpu_custom_call.1} parent=11 // pred_check
          %p271 = pneg %p191
        $region38: #{tpu_custom_call.1} parent=11 // pred_check_branch
          %273 = sbr.rel (%p271) target = $region40
        $region39: #{tpu_custom_call.1} parent=11 // pred_region
          _
        $region40: #{tpu_custom_call.1} parent=11 // pred_fallthru
          _
        // Predicated region
        $region41: #{tpu_custom_call.1} parent=11 // pred_check
          %p274 = pneg %p212
        $region42: #{tpu_custom_call.1} parent=11 // pred_check_branch
          %276 = sbr.rel (%p274) target = $region44
        $region43: #{tpu_custom_call.1} parent=11 // pred_region
          _
        $region44: #{tpu_custom_call.1} parent=11 // pred_fallthru
          _
      $region12: #{tpu_custom_call.1} parent=5 // pred_fallthru
        _
      %p277 = scmp.lt.s32.totalorder %s18, 2
      // Predicated region
      $region45: #{tpu_custom_call.1} parent=5 // pred_check
        %p278 = pneg %p277
      $region46: #{tpu_custom_call.1} parent=5 // pred_check_branch
        %280 = sbr.rel (%p278) target = $region48
      $region47: #{tpu_custom_call.1} parent=5 // pred_region
        // Predicated region
        $region49: #{tpu_custom_call.1} parent=47 // pred_check
          %p281 = pneg %p38
        $region50: #{tpu_custom_call.1} parent=47 // pred_check_branch
          %283 = sbr.rel (%p281) target = $region52
        $region51: #{tpu_custom_call.1} parent=47 // pred_region
          %s284 = smul.u32 16, %s18
          %p285 = scmp.lt.s32.totalorder %s284, 31
          %s286 = scalar_select %p285, %s284, 31
          %s287 = smul.addr %s286, 4
          %s288 = scalar_lea.vmem %s0, %s287
          %s289 = smul.u32 16, %s18
        $region52: #{tpu_custom_call.1} parent=47 // pred_fallthru
          _
      $region48: #{tpu_custom_call.1} parent=5 // pred_fallthru
        _
      %p290 = scmp.le.s32.totalorder 1, %s18
      %p291 = scmp.lt.s32.totalorder %s18, 3
      %p292 = pnand %p290, %p291
      %p293 = pneg %p292
      // Predicated region
      $region53: #{tpu_custom_call.1} parent=5 // pred_check
        _
      $region54: #{tpu_custom_call.1} parent=5 // pred_check_branch
        %295 = sbr.rel (%p292) target = $region56
      $region55: #{tpu_custom_call.1} parent=5 // pred_region
        %s296 = ssub.s32 %s18, 1
        %s297 = smul.u32 16, %s23
        %p298 = scmp.lt.s32.totalorder %s297, 31
        %s299 = scalar_select %p298, %s297, 31
        %s300 = smul.addr %s299, 4
        %s301 = scalar_lea.vmem %s0, %s300
        %p302 = pneg %p44
        %p303 = pneg %p41
        %p304 = pneg %p65
        %p305 = pneg %p62
        %p306 = pneg %p86
        %p307 = pneg %p83
        %p308 = pneg %p107
        %p309 = pneg %p104
        %p310 = pneg %p128
        %p311 = pneg %p125
        %p312 = pneg %p149
        %p313 = pneg %p146
        %p314 = pneg %p170
        %p315 = pneg %p167
        %p316 = pneg %p191
        %p317 = pneg %p188
        %p318 = pneg %p212
        %p319 = pneg %p209
        %p320 = pneg %p238
        %p321 = pneg %p235
        %s322 = sand.u32 %s225, 1
        %s323 = scalar_lea.sflag [#allocation3], %s322
        %s324 = sand.u32 %s225, 1
        %s325 = smul.addr %s324, 128
        %s326 = scalar_lea.vmem [#allocation2], %s325
        %s327 = smul.u32 16, %s23
        %p328 = scmp.lt.s32.totalorder %s327, 31
        %s329 = scalar_select %p328, %s327, 31
        %s330 = smul.addr %s329, 4
        %s331 = scalar_lea.vmem %s0, %s330
        %s332 = smul.u32 16, %s23
        %s333 = smul.u32 16, %s23
        %v335 = vld [vmem:[%s331] sm:$0xf]
        %v336 = vld [vmem:[%s331 + $0x4] sm:$0xf]
        %v337 = vld [vmem:[%s331 + $0x8] sm:$0xf]
        %v338 = vld [vmem:[%s331 + $0xc] sm:$0xf]
        %v339 = vld [vmem:[%s331 + $0x10] sm:$0xf]
        %v340 = vld [vmem:[%s331 + $0x14] sm:$0xf]
        %v341 = vld [vmem:[%s331 + $0x18] sm:$0xf]
        %v342 = vld [vmem:[%s331 + $0x1c] sm:$0xf]
        %v343 = vld [vmem:[%s331 + $0x20] sm:$0xf]
        %v344 = vld [vmem:[%s331 + $0x24] sm:$0xf]
        %v345 = vld [vmem:[%s331 + $0x28] sm:$0xf]
        %v346 = vld [vmem:[%s331 + $0x2c] sm:$0xf]
        %v347 = vld [vmem:[%s331 + $0x30] sm:$0xf]
        %v348 = vld [vmem:[%s331 + $0x34] sm:$0xf]
        %v349 = vld [vmem:[%s331 + $0x38] sm:$0xf]
        %v350 = vld [vmem:[%s331 + $0x3c] sm:$0xf]
        %v351 = vld [vmem:[%s1] sm:$0xf]
        %v352 = vld [vmem:[%s1 + $0x4] sm:$0xf]
        %v353 = vld [vmem:[%s1 + $0x8] sm:$0xf]
        %v354 = vld [vmem:[%s1 + $0xc] sm:$0xf]
        %v355 = vld [vmem:[%s2] sm:$0x1]
        %v357 = vlaneseq
        %v358 = vshrl.u32 %v357, 7
        %v359 = vsub.s32 0, %v358
        %v360 = vrot.slane %v355, %v359
        %v378 = vunpack.c.l.b16 %v335
        %v379 = vunpack.c.l.b16 %v336
        %v380 = vunpack.c.l.b16 %v337
        %v381 = vunpack.c.l.b16 %v338
        %v382 = vunpack.c.l.b16 %v339
        %v383 = vunpack.c.l.b16 %v340
        %v384 = vunpack.c.l.b16 %v341
        %v385 = vunpack.c.l.b16 %v342
        %v386 = vunpack.c.l.b16 %v343
        %v387 = vunpack.c.l.b16 %v344
        %v388 = vunpack.c.l.b16 %v345
        %v389 = vunpack.c.l.b16 %v346
        %v390 = vunpack.c.l.b16 %v347
        %v391 = vunpack.c.l.b16 %v348
        %v392 = vunpack.c.l.b16 %v349
        %v393 = vunpack.c.l.b16 %v350
        %v394 = vpack.c.b16 %v379, %v378
        %v395 = vpack.c.b16 %v381, %v380
        %v396 = vpack.c.b16 %v383, %v382
        %v397 = vpack.c.b16 %v385, %v384
        %v398 = vpack.c.b16 %v387, %v386
        %v399 = vpack.c.b16 %v389, %v388
        %v400 = vpack.c.b16 %v391, %v390
        %v401 = vpack.c.b16 %v393, %v392
        %v406 = vunpack.c.l.b16 %v351
        %v407 = vunpack.c.l.b16 %v352
        %v408 = vunpack.c.l.b16 %v353
        %v409 = vunpack.c.l.b16 %v354
        %v410 = vpack.c.b16 %v407, %v406
        %v411 = vpack.c.b16 %v409, %v408
        %vm414 = vcmask 261120
        %v416 = vsel %vm414, %v394, 0
        %v419 = vsel %vm414, %v395, 0
        %v422 = vsel %vm414, %v396, 0
        %v425 = vsel %vm414, %v397, 0
        %v428 = vsel %vm414, %v398, 0
        %v431 = vsel %vm414, %v399, 0
        %v434 = vsel %vm414, %v400, 0
        %v437 = vsel %vm414, %v401, 0
        %439 = vmatprep.subr.bf16.mxu0 0
        %440 = vmatpush1.bf16.msra.mxu0 %v410
        %441 = vmatprep.subr.bf16.mxu0 0
        %442 = vmatpush1.bf16.msra.mxu0 %v411
        %443 = vmatprep.subr.bf16.mxu0 0
        %444 = vmatpush1.bf16.msra.mxu0 0
        %445 = vmatprep.subr.bf16.mxu0 0
        %446 = vmatpush1.bf16.msra.mxu0 0
        %447 = vmatprep.subr.bf16.mxu0 0
        %448 = vmatpush1.bf16.msra.mxu0 0
        %449 = vmatprep.subr.bf16.mxu0 0
        %450 = vmatpush1.bf16.msra.mxu0 0
        %451 = vmatprep.subr.bf16.mxu0 0
        %452 = vmatpush1.bf16.msra.mxu0 0
        %453 = vmatprep.subr.bf16.mxu0 0
        %454 = vmatpush1.bf16.msra.mxu0 0
        %455 = vmatprep.subr.bf16.mxu0 0
        %456 = vmatpush1.bf16.msra.mxu0 0
        %457 = vmatprep.subr.bf16.mxu0 0
        %458 = vmatpush1.bf16.msra.mxu0 0
        %459 = vmatprep.subr.bf16.mxu0 0
        %460 = vmatpush1.bf16.msra.mxu0 0
        %461 = vmatprep.subr.bf16.mxu0 0
        %462 = vmatpush1.bf16.msra.mxu0 0
        %463 = vmatprep.subr.bf16.mxu0 0
        %464 = vmatpush1.bf16.msra.mxu0 0
        %465 = vmatprep.subr.bf16.mxu0 0
        %466 = vmatpush1.bf16.msra.mxu0 0
        %467 = vmatprep.subr.bf16.mxu0 0
        %468 = vmatpush1.bf16.msra.mxu0 0
        %469 = vmatprep.subr.bf16.mxu0 0
        %470 = vmatpush1.bf16.msra.mxu0 0
        %471 = vmatprep.mubr.bf16.mxu0 0
        %472 = vmatmul.mubr.bf16.gmra.mrb[0].mxu0 %v416
        %v473 = vpop.f32.mrb[0].mxu0
        %v474 = vadd.f32 %v360, %v473
        %v475 = vpop.f32.mrb[0].mxu0
        %v476 = vpop.f32.mrb[0].mxu0
        %v477 = vadd.f32 %v360, %v476
        %v478 = vpop.f32.mrb[0].mxu0
        %479 = vmatprep.mubr.bf16.mxu0 0
        %480 = vmatmul.mubr.bf16.gmra.mrb[0].mxu0 %v419
        %v481 = vpop.f32.mrb[0].mxu0
        %v482 = vadd.f32 %v360, %v481
        %v483 = vpop.f32.mrb[0].mxu0
        %v484 = vpop.f32.mrb[0].mxu0
        %v485 = vadd.f32 %v360, %v484
        %v486 = vpop.f32.mrb[0].mxu0
        %487 = vmatprep.mubr.bf16.mxu0 0
        %488 = vmatmul.mubr.bf16.gmra.mrb[0].mxu0 %v422
        %v489 = vpop.f32.mrb[0].mxu0
        %v490 = vadd.f32 %v360, %v489
        %v491 = vpop.f32.mrb[0].mxu0
        %v492 = vpop.f32.mrb[0].mxu0
        %v493 = vadd.f32 %v360, %v492
        %v494 = vpop.f32.mrb[0].mxu0
        %495 = vmatprep.mubr.bf16.mxu0 0
        %496 = vmatmul.mubr.bf16.gmra.mrb[0].mxu0 %v425
        %v497 = vpop.f32.mrb[0].mxu0
        %v498 = vadd.f32 %v360, %v497
        %v499 = vpop.f32.mrb[0].mxu0
        %v500 = vpop.f32.mrb[0].mxu0
        %v501 = vadd.f32 %v360, %v500
        %v502 = vpop.f32.mrb[0].mxu0
        %503 = vmatprep.mubr.bf16.mxu0 0
        %504 = vmatmul.mubr.bf16.gmra.mrb[0].mxu0 %v428
        %v505 = vpop.f32.mrb[0].mxu0
        %v506 = vadd.f32 %v360, %v505
        %v507 = vpop.f32.mrb[0].mxu0
        %v508 = vpop.f32.mrb[0].mxu0
        %v509 = vadd.f32 %v360, %v508
        %v510 = vpop.f32.mrb[0].mxu0
        %511 = vmatprep.mubr.bf16.mxu0 0
        %512 = vmatmul.mubr.bf16.gmra.mrb[0].mxu0 %v431
        %v513 = vpop.f32.mrb[0].mxu0
        %v514 = vadd.f32 %v360, %v513
        %v515 = vpop.f32.mrb[0].mxu0
        %v516 = vpop.f32.mrb[0].mxu0
        %v517 = vadd.f32 %v360, %v516
        %v518 = vpop.f32.mrb[0].mxu0
        %519 = vmatprep.mubr.bf16.mxu0 0
        %520 = vmatmul.mubr.bf16.gmra.mrb[0].mxu0 %v434
        %v521 = vpop.f32.mrb[0].mxu0
        %v522 = vadd.f32 %v360, %v521
        %v523 = vpop.f32.mrb[0].mxu0
        %v524 = vpop.f32.mrb[0].mxu0
        %v525 = vadd.f32 %v360, %v524
        %v526 = vpop.f32.mrb[0].mxu0
        %527 = vmatprep.mubr.bf16.mxu0 0
        %528 = vmatmul.mubr.bf16.gmra.mrb[0].mxu0 %v437
        %v529 = vpop.f32.mrb[0].mxu0
        %v530 = vadd.f32 %v360, %v529
        %v531 = vpop.f32.mrb[0].mxu0
        %v532 = vpop.f32.mrb[0].mxu0
        %v533 = vadd.f32 %v360, %v532
        %v534 = vpop.f32.mrb[0].mxu0
        %535 = vdwg.mxu0
        %v536 = vmax.f32 %v474, 0.0
        %v537 = vmax.f32 %v477, 0.0
        %v538 = vmax.f32 %v482, 0.0
        %v539 = vmax.f32 %v485, 0.0
        %v540 = vmax.f32 %v490, 0.0
        %v541 = vmax.f32 %v493, 0.0
        %v542 = vmax.f32 %v498, 0.0
        %v543 = vmax.f32 %v501, 0.0
        %v544 = vmax.f32 %v506, 0.0
        %v545 = vmax.f32 %v509, 0.0
        %v546 = vmax.f32 %v514, 0.0
        %v547 = vmax.f32 %v517, 0.0
        %v548 = vmax.f32 %v522, 0.0
        %v549 = vmax.f32 %v525, 0.0
        %v550 = vmax.f32 %v530, 0.0
        %v551 = vmax.f32 %v533, 0.0
        %v552 = vpack.c.bf16 %v537, %v536
        %v553 = vpack.c.bf16 %v539, %v538
        %v554 = vpack.c.bf16 %v541, %v540
        %v555 = vpack.c.bf16 %v543, %v542
        %v556 = vpack.c.bf16 %v545, %v544
        %v557 = vpack.c.bf16 %v547, %v546
        %v558 = vpack.c.bf16 %v549, %v548
        %v559 = vpack.c.bf16 %v551, %v550
        %v560 = vld [vmem:[%s3] sm:$0xf]
        %v561 = vld [vmem:[%s3 + $0x4] sm:$0xf]
        %v562 = vld [vmem:[%s3 + $0x8] sm:$0xf]
        %v563 = vld [vmem:[%s3 + $0xc] sm:$0xf]
        %v564 = vld [vmem:[%s4] sm:$0x1]
        %v566 = vlaneseq
        %v567 = vshrl.u32 %v566, 7
        %v568 = vsub.s32 0, %v567
        %v569 = vrot.slane %v564, %v568
        %v575 = vunpack.c.l.b16 %v560
        %v576 = vunpack.c.l.b16 %v561
        %v577 = vunpack.c.l.b16 %v562
        %v578 = vunpack.c.l.b16 %v563
        %v579 = vpack.c.b16 %v576, %v575
        %v580 = vpack.c.b16 %v578, %v577
        %v584 = vsel %vm414, %v552, 0
        %v587 = vsel %vm414, %v553, 0
        %v590 = vsel %vm414, %v554, 0
        %v593 = vsel %vm414, %v555, 0
        %v596 = vsel %vm414, %v556, 0
        %v599 = vsel %vm414, %v557, 0
        %v602 = vsel %vm414, %v558, 0
        %v605 = vsel %vm414, %v559, 0
        %607 = vmatprep.subr.bf16.mxu0 0
        %608 = vmatpush1.bf16.msra.mxu0 %v579
        %609 = vmatprep.subr.bf16.mxu0 0
        %610 = vmatpush1.bf16.msra.mxu0 %v580
        %611 = vmatprep.subr.bf16.mxu0 0
        %612 = vmatpush1.bf16.msra.mxu0 0
        %613 = vmatprep.subr.bf16.mxu0 0
        %614 = vmatpush1.bf16.msra.mxu0 0
        %615 = vmatprep.subr.bf16.mxu0 0
        %616 = vmatpush1.bf16.msra.mxu0 0
        %617 = vmatprep.subr.bf16.mxu0 0
        %618 = vmatpush1.bf16.msra.mxu0 0
        %619 = vmatprep.subr.bf16.mxu0 0
        %620 = vmatpush1.bf16.msra.mxu0 0
        %621 = vmatprep.subr.bf16.mxu0 0
        %622 = vmatpush1.bf16.msra.mxu0 0
        %623 = vmatprep.subr.bf16.mxu0 0
        %624 = vmatpush1.bf16.msra.mxu0 0
        %625 = vmatprep.subr.bf16.mxu0 0
        %626 = vmatpush1.bf16.msra.mxu0 0
        %627 = vmatprep.subr.bf16.mxu0 0
        %628 = vmatpush1.bf16.msra.mxu0 0
        %629 = vmatprep.subr.bf16.mxu0 0
        %630 = vmatpush1.bf16.msra.mxu0 0
        %631 = vmatprep.subr.bf16.mxu0 0
        %632 = vmatpush1.bf16.msra.mxu0 0
        %633 = vmatprep.subr.bf16.mxu0 0
        %634 = vmatpush1.bf16.msra.mxu0 0
        %635 = vmatprep.subr.bf16.mxu0 0
        %636 = vmatpush1.bf16.msra.mxu0 0
        %637 = vmatprep.subr.bf16.mxu0 0
        %638 = vmatpush1.bf16.msra.mxu0 0
        %639 = vmatprep.mubr.bf16.mxu0 0
        %640 = vmatmul.mubr.bf16.gmra.mrb[0].mxu0 %v584
        %v641 = vpop.f32.mrb[0].mxu0
        %v642 = vadd.f32 %v569, %v641
        %v643 = vpop.f32.mrb[0].mxu0
        %v644 = vpop.f32.mrb[0].mxu0
        %v645 = vadd.f32 %v569, %v644
        %v646 = vpop.f32.mrb[0].mxu0
        %647 = vmatprep.mubr.bf16.mxu0 0
        %648 = vmatmul.mubr.bf16.gmra.mrb[0].mxu0 %v587
        %v649 = vpop.f32.mrb[0].mxu0
        %v650 = vadd.f32 %v569, %v649
        %v651 = vpop.f32.mrb[0].mxu0
        %v652 = vpop.f32.mrb[0].mxu0
        %v653 = vadd.f32 %v569, %v652
        %v654 = vpop.f32.mrb[0].mxu0
        %655 = vmatprep.mubr.bf16.mxu0 0
        %656 = vmatmul.mubr.bf16.gmra.mrb[0].mxu0 %v590
        %v657 = vpop.f32.mrb[0].mxu0
        %v658 = vadd.f32 %v569, %v657
        %v659 = vpop.f32.mrb[0].mxu0
        %v660 = vpop.f32.mrb[0].mxu0
        %v661 = vadd.f32 %v569, %v660
        %v662 = vpop.f32.mrb[0].mxu0
        %663 = vmatprep.mubr.bf16.mxu0 0
        %664 = vmatmul.mubr.bf16.gmra.mrb[0].mxu0 %v593
        %v665 = vpop.f32.mrb[0].mxu0
        %v666 = vadd.f32 %v569, %v665
        %v667 = vpop.f32.mrb[0].mxu0
        %v668 = vpop.f32.mrb[0].mxu0
        %v669 = vadd.f32 %v569, %v668
        %v670 = vpop.f32.mrb[0].mxu0
        %671 = vmatprep.mubr.bf16.mxu0 0
        %672 = vmatmul.mubr.bf16.gmra.mrb[0].mxu0 %v596
        %v673 = vpop.f32.mrb[0].mxu0
        %v674 = vadd.f32 %v569, %v673
        %v675 = vpop.f32.mrb[0].mxu0
        %v676 = vpop.f32.mrb[0].mxu0
        %v677 = vadd.f32 %v569, %v676
        %v678 = vpop.f32.mrb[0].mxu0
        %679 = vmatprep.mubr.bf16.mxu0 0
        %680 = vmatmul.mubr.bf16.gmra.mrb[0].mxu0 %v599
        %v681 = vpop.f32.mrb[0].mxu0
        %v682 = vadd.f32 %v569, %v681
        %v683 = vpop.f32.mrb[0].mxu0
        %v684 = vpop.f32.mrb[0].mxu0
        %v685 = vadd.f32 %v569, %v684
        %v686 = vpop.f32.mrb[0].mxu0
        %687 = vmatprep.mubr.bf16.mxu0 0
        %688 = vmatmul.mubr.bf16.gmra.mrb[0].mxu0 %v602
        %v689 = vpop.f32.mrb[0].mxu0
        %v690 = vadd.f32 %v569, %v689
        %v691 = vpop.f32.mrb[0].mxu0
        %v692 = vpop.f32.mrb[0].mxu0
        %v693 = vadd.f32 %v569, %v692
        %v694 = vpop.f32.mrb[0].mxu0
        %695 = vmatprep.mubr.bf16.mxu0 0
        %696 = vmatmul.mubr.bf16.gmra.mrb[0].mxu0 %v605
        %v697 = vpop.f32.mrb[0].mxu0
        %v698 = vadd.f32 %v569, %v697
        %v699 = vpop.f32.mrb[0].mxu0
        %v700 = vpop.f32.mrb[0].mxu0
        %v701 = vadd.f32 %v569, %v700
        %v702 = vpop.f32.mrb[0].mxu0
        %703 = vdwg.mxu0
        %vm704 = vcmask 31744
        %v705 = vsel %vm704, %v642, -inf
        %706 = vmax.xlane.f32.xlu0 %v705
        %v707 = vpop.xlane.xlu0 %706
        %v708 = vsel %vm704, %v645, -inf
        %709 = vmax.xlane.f32.xlu0 %v708
        %v710 = vpop.xlane.xlu0 %709
        %v711 = vsel %vm704, %v650, -inf
        %712 = vmax.xlane.f32.xlu0 %v711
        %v713 = vpop.xlane.xlu0 %712
        %v714 = vsel %vm704, %v653, -inf
        %715 = vmax.xlane.f32.xlu0 %v714
        %v716 = vpop.xlane.xlu0 %715
        %v717 = vsel %vm704, %v658, -inf
        %718 = vmax.xlane.f32.xlu0 %v717
        %v719 = vpop.xlane.xlu0 %718
        %v720 = vsel %vm704, %v661, -inf
        %721 = vmax.xlane.f32.xlu0 %v720
        %v722 = vpop.xlane.xlu0 %721
        %v723 = vsel %vm704, %v666, -inf
        %724 = vmax.xlane.f32.xlu0 %v723
        %v725 = vpop.xlane.xlu0 %724
        %v726 = vsel %vm704, %v669, -inf
        %727 = vmax.xlane.f32.xlu0 %v726
        %v728 = vpop.xlane.xlu0 %727
        %v729 = vsel %vm704, %v674, -inf
        %730 = vmax.xlane.f32.xlu0 %v729
        %v731 = vpop.xlane.xlu0 %730
        %v732 = vsel %vm704, %v677, -inf
        %733 = vmax.xlane.f32.xlu0 %v732
        %v734 = vpop.xlane.xlu0 %733
        %v735 = vsel %vm704, %v682, -inf
        %736 = vmax.xlane.f32.xlu0 %v735
        %v737 = vpop.xlane.xlu0 %736
        %v738 = vsel %vm704, %v685, -inf
        %739 = vmax.xlane.f32.xlu0 %v738
        %v740 = vpop.xlane.xlu0 %739
        %v741 = vsel %vm704, %v690, -inf
        %742 = vmax.xlane.f32.xlu0 %v741
        %v743 = vpop.xlane.xlu0 %742
        %v744 = vsel %vm704, %v693, -inf
        %745 = vmax.xlane.f32.xlu0 %v744
        %v746 = vpop.xlane.xlu0 %745
        %v747 = vsel %vm704, %v698, -inf
        %748 = vmax.xlane.f32.xlu0 %v747
        %v749 = vpop.xlane.xlu0 %748
        %v750 = vsel %vm704, %v701, -inf
        %751 = vmax.xlane.f32.xlu0 %v750
        %v752 = vpop.xlane.xlu0 %751
        %v753 = vsub.f32 %v642, %v707
        %v754 = vsub.f32 %v645, %v710
        %v755 = vsub.f32 %v650, %v713
        %v756 = vsub.f32 %v653, %v716
        %v757 = vsub.f32 %v658, %v719
        %v758 = vsub.f32 %v661, %v722
        %v759 = vsub.f32 %v666, %v725
        %v760 = vsub.f32 %v669, %v728
        %v761 = vsub.f32 %v674, %v731
        %v762 = vsub.f32 %v677, %v734
        %v763 = vsub.f32 %v682, %v737
        %v764 = vsub.f32 %v685, %v740
        %v765 = vsub.f32 %v690, %v743
        %v766 = vsub.f32 %v693, %v746
        %v767 = vsub.f32 %v698, %v749
        %v768 = vsub.f32 %v701, %v752
        %v769 = vmul.f32 %v753, 1.442695
        %v770 = vpow.pop %v769
        %v771 = vmul.f32 %v754, 1.442695
        %v772 = vpow.pop %v771
        %v773 = vmul.f32 %v755, 1.442695
        %v774 = vpow.pop %v773
        %v775 = vmul.f32 %v756, 1.442695
        %v776 = vpow.pop %v775
        %v777 = vmul.f32 %v757, 1.442695
        %v778 = vpow.pop %v777
        %v779 = vmul.f32 %v758, 1.442695
        %v780 = vpow.pop %v779
        %v781 = vmul.f32 %v759, 1.442695
        %v782 = vpow.pop %v781
        %v783 = vmul.f32 %v760, 1.442695
        %v784 = vpow.pop %v783
        %v785 = vmul.f32 %v761, 1.442695
        %v786 = vpow.pop %v785
        %v787 = vmul.f32 %v762, 1.442695
        %v788 = vpow.pop %v787
        %v789 = vmul.f32 %v763, 1.442695
        %v790 = vpow.pop %v789
        %v791 = vmul.f32 %v764, 1.442695
        %v792 = vpow.pop %v791
        %v793 = vmul.f32 %v765, 1.442695
        %v794 = vpow.pop %v793
        %v795 = vmul.f32 %v766, 1.442695
        %v796 = vpow.pop %v795
        %v797 = vmul.f32 %v767, 1.442695
        %v798 = vpow.pop %v797
        %v799 = vmul.f32 %v768, 1.442695
        %v800 = vpow.pop %v799
        %v801 = vsel %vm704, %v770, 0.0
        %802 = vadd.xlane.f32.xlu0 %v801
        %v803 = vpop.xlane.xlu0 %802
        %v804 = vsel %vm704, %v772, 0.0
        %805 = vadd.xlane.f32.xlu0 %v804
        %v806 = vpop.xlane.xlu0 %805
        %v807 = vsel %vm704, %v774, 0.0
        %808 = vadd.xlane.f32.xlu0 %v807
        %v809 = vpop.xlane.xlu0 %808
        %v810 = vsel %vm704, %v776, 0.0
        %811 = vadd.xlane.f32.xlu0 %v810
        %v812 = vpop.xlane.xlu0 %811
        %v813 = vsel %vm704, %v778, 0.0
        %814 = vadd.xlane.f32.xlu0 %v813
        %v815 = vpop.xlane.xlu0 %814
        %v816 = vsel %vm704, %v780, 0.0
        %817 = vadd.xlane.f32.xlu0 %v816
        %v818 = vpop.xlane.xlu0 %817
        %v819 = vsel %vm704, %v782, 0.0
        %820 = vadd.xlane.f32.xlu0 %v819
        %v821 = vpop.xlane.xlu0 %820
        %v822 = vsel %vm704, %v784, 0.0
        %823 = vadd.xlane.f32.xlu0 %v822
        %v824 = vpop.xlane.xlu0 %823
        %v825 = vsel %vm704, %v786, 0.0
        %826 = vadd.xlane.f32.xlu0 %v825
        %v827 = vpop.xlane.xlu0 %826
        %v828 = vsel %vm704, %v788, 0.0
        %829 = vadd.xlane.f32.xlu0 %v828
        %v830 = vpop.xlane.xlu0 %829
        %v831 = vsel %vm704, %v790, 0.0
        %832 = vadd.xlane.f32.xlu0 %v831
        %v833 = vpop.xlane.xlu0 %832
        %v834 = vsel %vm704, %v792, 0.0
        %835 = vadd.xlane.f32.xlu0 %v834
        %v836 = vpop.xlane.xlu0 %835
        %v837 = vsel %vm704, %v794, 0.0
        %838 = vadd.xlane.f32.xlu0 %v837
        %v839 = vpop.xlane.xlu0 %838
        %v840 = vsel %vm704, %v796, 0.0
        %841 = vadd.xlane.f32.xlu0 %v840
        %v842 = vpop.xlane.xlu0 %841
        %v843 = vsel %vm704, %v798, 0.0
        %844 = vadd.xlane.f32.xlu0 %v843
        %v845 = vpop.xlane.xlu0 %844
        %v846 = vsel %vm704, %v800, 0.0
        %847 = vadd.xlane.f32.xlu0 %v846
        %v848 = vpop.xlane.xlu0 %847
        %v849 = vrcp.pop %v803
        %v850 = vrcp.pop %v806
        %v851 = vrcp.pop %v809
        %v852 = vrcp.pop %v812
        %v853 = vrcp.pop %v815
        %v854 = vrcp.pop %v818
        %v855 = vrcp.pop %v821
        %v856 = vrcp.pop %v824
        %v857 = vrcp.pop %v827
        %v858 = vrcp.pop %v830
        %v859 = vrcp.pop %v833
        %v860 = vrcp.pop %v836
        %v861 = vrcp.pop %v839
        %v862 = vrcp.pop %v842
        %v863 = vrcp.pop %v845
        %v864 = vrcp.pop %v848
        %v865 = vmul.f32 %v770, %v849
        %v866 = vmul.f32 %v772, %v850
        %v867 = vmul.f32 %v774, %v851
        %v868 = vmul.f32 %v776, %v852
        %v869 = vmul.f32 %v778, %v853
        %v870 = vmul.f32 %v780, %v854
        %v871 = vmul.f32 %v782, %v855
        %v872 = vmul.f32 %v784, %v856
        %v873 = vmul.f32 %v786, %v857
        %v874 = vmul.f32 %v788, %v858
        %v875 = vmul.f32 %v790, %v859
        %v876 = vmul.f32 %v792, %v860
        %v877 = vmul.f32 %v794, %v861
        %v878 = vmul.f32 %v796, %v862
        %v879 = vmul.f32 %v798, %v863
        %v880 = vmul.f32 %v800, %v864
        %v881 = vld [vmem:[%s5] sm:$0xf]
        %v882 = vld [vmem:[%s5 + $0x4] sm:$0xf]
        %v883 = vld [vmem:[%s5 + $0x8] sm:$0xf]
        %v884 = vld [vmem:[%s5 + $0xc] sm:$0xf]
        %v885 = vld [vmem:[%s6] sm:$0x1]
        %v887 = vlaneseq
        %v888 = vshrl.u32 %v887, 7
        %v889 = vsub.s32 0, %v888
        %v890 = vrot.slane %v885, %v889
        %v896 = vunpack.c.l.b16 %v881
        %v897 = vunpack.c.l.b16 %v882
        %v898 = vunpack.c.l.b16 %v883
        %v899 = vunpack.c.l.b16 %v884
        %v900 = vpack.c.b16 %v897, %v896
        %v901 = vpack.c.b16 %v899, %v898
        %904 = vmatprep.subr.bf16.mxu0 0
        %905 = vmatpush1.bf16.msra.mxu0 %v900
        %906 = vmatprep.subr.bf16.mxu0 0
        %907 = vmatpush1.bf16.msra.mxu0 %v901
        %908 = vmatprep.subr.bf16.mxu0 0
        %909 = vmatpush1.bf16.msra.mxu0 0
        %910 = vmatprep.subr.bf16.mxu0 0
        %911 = vmatpush1.bf16.msra.mxu0 0
        %912 = vmatprep.subr.bf16.mxu0 0
        %913 = vmatpush1.bf16.msra.mxu0 0
        %914 = vmatprep.subr.bf16.mxu0 0
        %915 = vmatpush1.bf16.msra.mxu0 0
        %916 = vmatprep.subr.bf16.mxu0 0
        %917 = vmatpush1.bf16.msra.mxu0 0
        %918 = vmatprep.subr.bf16.mxu0 0
        %919 = vmatpush1.bf16.msra.mxu0 0
        %920 = vmatprep.subr.bf16.mxu0 0
        %921 = vmatpush1.bf16.msra.mxu0 0
        %922 = vmatprep.subr.bf16.mxu0 0
        %923 = vmatpush1.bf16.msra.mxu0 0
        %924 = vmatprep.subr.bf16.mxu0 0
        %925 = vmatpush1.bf16.msra.mxu0 0
        %926 = vmatprep.subr.bf16.mxu0 0
        %927 = vmatpush1.bf16.msra.mxu0 0
        %928 = vmatprep.subr.bf16.mxu0 0
        %929 = vmatpush1.bf16.msra.mxu0 0
        %930 = vmatprep.subr.bf16.mxu0 0
        %931 = vmatpush1.bf16.msra.mxu0 0
        %932 = vmatprep.subr.bf16.mxu0 0
        %933 = vmatpush1.bf16.msra.mxu0 0
        %934 = vmatprep.subr.bf16.mxu0 0
        %935 = vmatpush1.bf16.msra.mxu0 0
        %936 = vmatprep.mubr.bf16.mxu0 0
        %937 = vmatmul.mubr.bf16.gmra.mrb[0].mxu0 %v416
        %v938 = vpop.f32.mrb[0].mxu0
        %v939 = vadd.f32 %v890, %v938
        %v940 = vpop.f32.mrb[0].mxu0
        %v941 = vpop.f32.mrb[0].mxu0
        %v942 = vadd.f32 %v890, %v941
        %v943 = vpop.f32.mrb[0].mxu0
        %944 = vmatprep.mubr.bf16.mxu0 0
        %945 = vmatmul.mubr.bf16.gmra.mrb[0].mxu0 %v419
        %v946 = vpop.f32.mrb[0].mxu0
        %v947 = vadd.f32 %v890, %v946
        %v948 = vpop.f32.mrb[0].mxu0
        %v949 = vpop.f32.mrb[0].mxu0
        %v950 = vadd.f32 %v890, %v949
        %v951 = vpop.f32.mrb[0].mxu0
        %952 = vmatprep.mubr.bf16.mxu0 0
        %953 = vmatmul.mubr.bf16.gmra.mrb[0].mxu0 %v422
        %v954 = vpop.f32.mrb[0].mxu0
        %v955 = vadd.f32 %v890, %v954
        %v956 = vpop.f32.mrb[0].mxu0
        %v957 = vpop.f32.mrb[0].mxu0
        %v958 = vadd.f32 %v890, %v957
        %v959 = vpop.f32.mrb[0].mxu0
        %960 = vmatprep.mubr.bf16.mxu0 0
        %961 = vmatmul.mubr.bf16.gmra.mrb[0].mxu0 %v425
        %v962 = vpop.f32.mrb[0].mxu0
        %v963 = vadd.f32 %v890, %v962
        %v964 = vpop.f32.mrb[0].mxu0
        %v965 = vpop.f32.mrb[0].mxu0
        %v966 = vadd.f32 %v890, %v965
        %v967 = vpop.f32.mrb[0].mxu0
        %968 = vmatprep.mubr.bf16.mxu0 0
        %969 = vmatmul.mubr.bf16.gmra.mrb[0].mxu0 %v428
        %v970 = vpop.f32.mrb[0].mxu0
        %v971 = vadd.f32 %v890, %v970
        %v972 = vpop.f32.mrb[0].mxu0
        %v973 = vpop.f32.mrb[0].mxu0
        %v974 = vadd.f32 %v890, %v973
        %v975 = vpop.f32.mrb[0].mxu0
        %976 = vmatprep.mubr.bf16.mxu0 0
        %977 = vmatmul.mubr.bf16.gmra.mrb[0].mxu0 %v431
        %v978 = vpop.f32.mrb[0].mxu0
        %v979 = vadd.f32 %v890, %v978
        %v980 = vpop.f32.mrb[0].mxu0
        %v981 = vpop.f32.mrb[0].mxu0
        %v982 = vadd.f32 %v890, %v981
        %v983 = vpop.f32.mrb[0].mxu0
        %984 = vmatprep.mubr.bf16.mxu0 0
        %985 = vmatmul.mubr.bf16.gmra.mrb[0].mxu0 %v434
        %v986 = vpop.f32.mrb[0].mxu0
        %v987 = vadd.f32 %v890, %v986
        %v988 = vpop.f32.mrb[0].mxu0
        %v989 = vpop.f32.mrb[0].mxu0
        %v990 = vadd.f32 %v890, %v989
        %v991 = vpop.f32.mrb[0].mxu0
        %992 = vmatprep.mubr.bf16.mxu0 0
        %993 = vmatmul.mubr.bf16.gmra.mrb[0].mxu0 %v437
        %v994 = vpop.f32.mrb[0].mxu0
        %v995 = vadd.f32 %v890, %v994
        %v996 = vpop.f32.mrb[0].mxu0
        %v997 = vpop.f32.mrb[0].mxu0
        %v998 = vadd.f32 %v890, %v997
        %v999 = vpop.f32.mrb[0].mxu0
        %1000 = vdwg.mxu0
        %v1001 = vld [vmem:[%s7] sm:$0xf]
        %v1003 = vsel %vm704, %v865, 0
        %v1006 = vsel %vm704, %v866, 0
        %v1009 = vsel %vm704, %v867, 0
        %v1012 = vsel %vm704, %v868, 0
        %v1015 = vsel %vm704, %v869, 0
        %v1018 = vsel %vm704, %v870, 0
        %v1021 = vsel %vm704, %v871, 0
        %v1024 = vsel %vm704, %v872, 0
        %v1027 = vsel %vm704, %v873, 0
        %v1030 = vsel %vm704, %v874, 0
        %v1033 = vsel %vm704, %v875, 0
        %v1036 = vsel %vm704, %v876, 0
        %v1039 = vsel %vm704, %v877, 0
        %v1042 = vsel %vm704, %v878, 0
        %v1045 = vsel %vm704, %v879, 0
        %v1048 = vsel %vm704, %v880, 0
        %vm1050 = vcmask 1043456
        %v1052 = vsel %vm1050, %v1001, 0
        %1054 = vmatprep.subr.mxu0 0.0
        %1055 = vmatpush1.msra.mxu0 %v1052
        %1056 = vmatprep.subr.mxu0 0.0
        %1057 = vmatpush1.msra.mxu0 0.0
        %1058 = vmatprep.subr.mxu0 0.0
        %1059 = vmatpush1.msra.mxu0 0.0
        %1060 = vmatprep.subr.mxu0 0.0
        %1061 = vmatpush1.msra.mxu0 0.0
        %1062 = vmatprep.subr.mxu0 0.0
        %1063 = vmatpush1.msra.mxu0 0.0
        %1064 = vmatprep.subr.mxu0 0.0
        %1065 = vmatpush1.msra.mxu0 0.0
        %1066 = vmatprep.subr.mxu0 0.0
        %1067 = vmatpush1.msra.mxu0 0.0
        %1068 = vmatprep.subr.mxu0 0.0
        %1069 = vmatpush1.msra.mxu0 0.0
        %1070 = vmatprep.subr.mxu0 0.0
        %1071 = vmatpush1.msra.mxu0 0.0
        %1072 = vmatprep.subr.mxu0 0.0
        %1073 = vmatpush1.msra.mxu0 0.0
        %1074 = vmatprep.subr.mxu0 0.0
        %1075 = vmatpush1.msra.mxu0 0.0
        %1076 = vmatprep.subr.mxu0 0.0
        %1077 = vmatpush1.msra.mxu0 0.0
        %1078 = vmatprep.subr.mxu0 0.0
        %1079 = vmatpush1.msra.mxu0 0.0
        %1080 = vmatprep.subr.mxu0 0.0
        %1081 = vmatpush1.msra.mxu0 0.0
        %1082 = vmatprep.subr.mxu0 0.0
        %1083 = vmatpush1.msra.mxu0 0.0
        %1084 = vmatprep.subr.mxu0 0.0
        %1085 = vmatpush1.msra.mxu0 0.0
        %1086 = vmatprep.subr.mxu0 0.0
        %1087 = vmatpush1.msra.mxu0 0.0
        %1088 = vmatprep.subr.mxu0 0.0
        %1089 = vmatpush1.msra.mxu0 0.0
        %1090 = vmatprep.subr.mxu0 0.0
        %1091 = vmatpush1.msra.mxu0 0.0
        %1092 = vmatprep.subr.mxu0 0.0
        %1093 = vmatpush1.msra.mxu0 0.0
        %1094 = vmatprep.subr.mxu0 0.0
        %1095 = vmatpush1.msra.mxu0 0.0
        %1096 = vmatprep.subr.mxu0 0.0
        %1097 = vmatpush1.msra.mxu0 0.0
        %1098 = vmatprep.subr.mxu0 0.0
        %1099 = vmatpush1.msra.mxu0 0.0
        %1100 = vmatprep.subr.mxu0 0.0
        %1101 = vmatpush1.msra.mxu0 0.0
        %1102 = vmatprep.subr.mxu0 0.0
        %1103 = vmatpush1.msra.mxu0 0.0
        %1104 = vmatprep.subr.mxu0 0.0
        %1105 = vmatpush1.msra.mxu0 0.0
        %1106 = vmatprep.subr.mxu0 0.0
        %1107 = vmatpush1.msra.mxu0 0.0
        %1108 = vmatprep.subr.mxu0 0.0
        %1109 = vmatpush1.msra.mxu0 0.0
        %1110 = vmatprep.subr.mxu0 0.0
        %1111 = vmatpush1.msra.mxu0 0.0
        %1112 = vmatprep.subr.mxu0 0.0
        %1113 = vmatpush1.msra.mxu0 0.0
        %1114 = vmatprep.subr.mxu0 0.0
        %1115 = vmatpush1.msra.mxu0 0.0
        %1116 = vmatprep.subr.mxu0 0.0
        %1117 = vmatpush1.msra.mxu0 0.0
        %1118 = vmatprep.mubr.f32.mxu0 0.0
        %1119 = vmatmul.mubr.f32.gmra.mrb[0].mxu0 %v1003
        %v1120 = vpop.f32.mrb[0].mxu0
        %v1121 = vadd.f32 0.0, %v1120
        %v1122 = vpop.f32.mrb[0].mxu0
        %1123 = vmatprep.mubr.f32.mxu0 0.0
        %1124 = vmatmul.mubr.f32.gmra.mrb[0].mxu0 %v1006
        %v1125 = vpop.f32.mrb[0].mxu0
        %v1126 = vadd.f32 0.0, %v1125
        %v1127 = vpop.f32.mrb[0].mxu0
        %1128 = vmatprep.mubr.f32.mxu0 0.0
        %1129 = vmatmul.mubr.f32.gmra.mrb[0].mxu0 %v1009
        %v1130 = vpop.f32.mrb[0].mxu0
        %v1131 = vadd.f32 0.0, %v1130
        %v1132 = vpop.f32.mrb[0].mxu0
        %1133 = vmatprep.mubr.f32.mxu0 0.0
        %1134 = vmatmul.mubr.f32.gmra.mrb[0].mxu0 %v1012
        %v1135 = vpop.f32.mrb[0].mxu0
        %v1136 = vadd.f32 0.0, %v1135
        %v1137 = vpop.f32.mrb[0].mxu0
        %1138 = vmatprep.mubr.f32.mxu0 0.0
        %1139 = vmatmul.mubr.f32.gmra.mrb[0].mxu0 %v1015
        %v1140 = vpop.f32.mrb[0].mxu0
        %v1141 = vadd.f32 0.0, %v1140
        %v1142 = vpop.f32.mrb[0].mxu0
        %1143 = vmatprep.mubr.f32.mxu0 0.0
        %1144 = vmatmul.mubr.f32.gmra.mrb[0].mxu0 %v1018
        %v1145 = vpop.f32.mrb[0].mxu0
        %v1146 = vadd.f32 0.0, %v1145
        %v1147 = vpop.f32.mrb[0].mxu0
        %1148 = vmatprep.mubr.f32.mxu0 0.0
        %1149 = vmatmul.mubr.f32.gmra.mrb[0].mxu0 %v1021
        %v1150 = vpop.f32.mrb[0].mxu0
        %v1151 = vadd.f32 0.0, %v1150
        %v1152 = vpop.f32.mrb[0].mxu0
        %1153 = vmatprep.mubr.f32.mxu0 0.0
        %1154 = vmatmul.mubr.f32.gmra.mrb[0].mxu0 %v1024
        %v1155 = vpop.f32.mrb[0].mxu0
        %v1156 = vadd.f32 0.0, %v1155
        %v1157 = vpop.f32.mrb[0].mxu0
        %1158 = vmatprep.mubr.f32.mxu0 0.0
        %1159 = vmatmul.mubr.f32.gmra.mrb[0].mxu0 %v1027
        %v1160 = vpop.f32.mrb[0].mxu0
        %v1161 = vadd.f32 0.0, %v1160
        %v1162 = vpop.f32.mrb[0].mxu0
        %1163 = vmatprep.mubr.f32.mxu0 0.0
        %1164 = vmatmul.mubr.f32.gmra.mrb[0].mxu0 %v1030
        %v1165 = vpop.f32.mrb[0].mxu0
        %v1166 = vadd.f32 0.0, %v1165
        %v1167 = vpop.f32.mrb[0].mxu0
        %1168 = vmatprep.mubr.f32.mxu0 0.0
        %1169 = vmatmul.mubr.f32.gmra.mrb[0].mxu0 %v1033
        %v1170 = vpop.f32.mrb[0].mxu0
        %v1171 = vadd.f32 0.0, %v1170
        %v1172 = vpop.f32.mrb[0].mxu0
        %1173 = vmatprep.mubr.f32.mxu0 0.0
        %1174 = vmatmul.mubr.f32.gmra.mrb[0].mxu0 %v1036
        %v1175 = vpop.f32.mrb[0].mxu0
        %v1176 = vadd.f32 0.0, %v1175
        %v1177 = vpop.f32.mrb[0].mxu0
        %1178 = vmatprep.mubr.f32.mxu0 0.0
        %1179 = vmatmul.mubr.f32.gmra.mrb[0].mxu0 %v1039
        %v1180 = vpop.f32.mrb[0].mxu0
        %v1181 = vadd.f32 0.0, %v1180
        %v1182 = vpop.f32.mrb[0].mxu0
        %1183 = vmatprep.mubr.f32.mxu0 0.0
        %1184 = vmatmul.mubr.f32.gmra.mrb[0].mxu0 %v1042
        %v1185 = vpop.f32.mrb[0].mxu0
        %v1186 = vadd.f32 0.0, %v1185
        %v1187 = vpop.f32.mrb[0].mxu0
        %1188 = vmatprep.mubr.f32.mxu0 0.0
        %1189 = vmatmul.mubr.f32.gmra.mrb[0].mxu0 %v1045
        %v1190 = vpop.f32.mrb[0].mxu0
        %v1191 = vadd.f32 0.0, %v1190
        %v1192 = vpop.f32.mrb[0].mxu0
        %1193 = vmatprep.mubr.f32.mxu0 0.0
        %1194 = vmatmul.mubr.f32.gmra.mrb[0].mxu0 %v1048
        %v1195 = vpop.f32.mrb[0].mxu0
        %v1196 = vadd.f32 0.0, %v1195
        %v1197 = vpop.f32.mrb[0].mxu0
        %1198 = vdwg.mxu0
        %v1199 = vmul.f32 %v939, %v1121
        %v1200 = vmul.f32 %v942, %v1126
        %v1201 = vmul.f32 %v947, %v1131
        %v1202 = vmul.f32 %v950, %v1136
        %v1203 = vmul.f32 %v955, %v1141
        %v1204 = vmul.f32 %v958, %v1146
        %v1205 = vmul.f32 %v963, %v1151
        %v1206 = vmul.f32 %v966, %v1156
        %v1207 = vmul.f32 %v971, %v1161
        %v1208 = vmul.f32 %v974, %v1166
        %v1209 = vmul.f32 %v979, %v1171
        %v1210 = vmul.f32 %v982, %v1176
        %v1211 = vmul.f32 %v987, %v1181
        %v1212 = vmul.f32 %v990, %v1186
        %v1213 = vmul.f32 %v995, %v1191
        %v1214 = vmul.f32 %v998, %v1196
        %v1215 = vld [vmem:[%s8] sm:$0xff]
        %v1216 = vld [vmem:[%s8 + $0x8] sm:$0xff]
        %v1217 = vld [vmem:[%s8 + $0x10] sm:$0xff]
        %v1218 = vld [vmem:[%s8 + $0x18] sm:$0xff]
        %v1219 = vld [vmem:[%s8 + $0x20] sm:$0xff]
        %v1220 = vld [vmem:[%s8 + $0x28] sm:$0xff]
        %v1221 = vld [vmem:[%s8 + $0x30] sm:$0xff]
        %v1222 = vld [vmem:[%s8 + $0x38] sm:$0xff]
        %v1223 = vld [vmem:[%s8 + $0x40] sm:$0xff]
        %v1224 = vld [vmem:[%s8 + $0x48] sm:$0xff]
        %v1225 = vld [vmem:[%s8 + $0x50] sm:$0xff]
        %v1226 = vld [vmem:[%s8 + $0x58] sm:$0xff]
        %v1227 = vld [vmem:[%s8 + $0x60] sm:$0xff]
        %v1228 = vld [vmem:[%s8 + $0x68] sm:$0xff]
        %v1229 = vld [vmem:[%s8 + $0x70] sm:$0xff]
        %v1230 = vld [vmem:[%s8 + $0x78] sm:$0xff]
        %1231 = vmatprep.subr.mxu0 0.0
        %1232 = vmatpush1.msra.mxu0 %v1215
        %1233 = vmatprep.subr.mxu0 0.0
        %1234 = vmatpush1.msra.mxu0 %v1216
        %1235 = vmatprep.subr.mxu0 0.0
        %1236 = vmatpush1.msra.mxu0 %v1217
        %1237 = vmatprep.subr.mxu0 0.0
        %1238 = vmatpush1.msra.mxu0 %v1218
        %1239 = vmatprep.subr.mxu0 0.0
        %1240 = vmatpush1.msra.mxu0 %v1219
        %1241 = vmatprep.subr.mxu0 0.0
        %1242 = vmatpush1.msra.mxu0 %v1220
        %1243 = vmatprep.subr.mxu0 0.0
        %1244 = vmatpush1.msra.mxu0 %v1221
        %1245 = vmatprep.subr.mxu0 0.0
        %1246 = vmatpush1.msra.mxu0 %v1222
        %1247 = vmatprep.subr.mxu0 0.0
        %1248 = vmatpush1.msra.mxu0 %v1223
        %1249 = vmatprep.subr.mxu0 0.0
        %1250 = vmatpush1.msra.mxu0 %v1224
        %1251 = vmatprep.subr.mxu0 0.0
        %1252 = vmatpush1.msra.mxu0 %v1225
        %1253 = vmatprep.subr.mxu0 0.0
        %1254 = vmatpush1.msra.mxu0 %v1226
        %1255 = vmatprep.subr.mxu0 0.0
        %1256 = vmatpush1.msra.mxu0 %v1227
        %1257 = vmatprep.subr.mxu0 0.0
        %1258 = vmatpush1.msra.mxu0 %v1228
        %1259 = vmatprep.subr.mxu0 0.0
        %1260 = vmatpush1.msra.mxu0 %v1229
        %1261 = vmatprep.subr.mxu0 0.0
        %1262 = vmatpush1.msra.mxu0 %v1230
        %1263 = vmatprep.subr.mxu0 0.0
        %1264 = vmatpush1.msra.mxu0 0.0
        %1265 = vmatprep.subr.mxu0 0.0
        %1266 = vmatpush1.msra.mxu0 0.0
        %1267 = vmatprep.subr.mxu0 0.0
        %1268 = vmatpush1.msra.mxu0 0.0
        %1269 = vmatprep.subr.mxu0 0.0
        %1270 = vmatpush1.msra.mxu0 0.0
        %1271 = vmatprep.subr.mxu0 0.0
        %1272 = vmatpush1.msra.mxu0 0.0
        %1273 = vmatprep.subr.mxu0 0.0
        %1274 = vmatpush1.msra.mxu0 0.0
        %1275 = vmatprep.subr.mxu0 0.0
        %1276 = vmatpush1.msra.mxu0 0.0
        %1277 = vmatprep.subr.mxu0 0.0
        %1278 = vmatpush1.msra.mxu0 0.0
        %1279 = vmatprep.subr.mxu0 0.0
        %1280 = vmatpush1.msra.mxu0 0.0
        %1281 = vmatprep.subr.mxu0 0.0
        %1282 = vmatpush1.msra.mxu0 0.0
        %1283 = vmatprep.subr.mxu0 0.0
        %1284 = vmatpush1.msra.mxu0 0.0
        %1285 = vmatprep.subr.mxu0 0.0
        %1286 = vmatpush1.msra.mxu0 0.0
        %1287 = vmatprep.subr.mxu0 0.0
        %1288 = vmatpush1.msra.mxu0 0.0
        %1289 = vmatprep.subr.mxu0 0.0
        %1290 = vmatpush1.msra.mxu0 0.0
        %1291 = vmatprep.subr.mxu0 0.0
        %1292 = vmatpush1.msra.mxu0 0.0
        %1293 = vmatprep.subr.mxu0 0.0
        %1294 = vmatpush1.msra.mxu0 0.0
        %1295 = vmatprep.mubr.f32.mxu0 0.0
        %1296 = vmatmul.mubr.f32.gmra.mrb[0].mxu0 %v1199
        %v1297 = vpop.f32.mrb[0].mxu0
        %v1298 = vadd.f32 0.0, %v1297
        %v1299 = vpop.f32.mrb[0].mxu0
        %1300 = vmatprep.mubr.f32.mxu0 0.0
        %1301 = vmatmul.mubr.f32.gmra.mrb[0].mxu0 %v1200
        %v1302 = vpop.f32.mrb[0].mxu0
        %v1303 = vadd.f32 0.0, %v1302
        %v1304 = vpop.f32.mrb[0].mxu0
        %1305 = vmatprep.mubr.f32.mxu0 0.0
        %1306 = vmatmul.mubr.f32.gmra.mrb[0].mxu0 %v1201
        %v1307 = vpop.f32.mrb[0].mxu0
        %v1308 = vadd.f32 0.0, %v1307
        %v1309 = vpop.f32.mrb[0].mxu0
        %1310 = vmatprep.mubr.f32.mxu0 0.0
        %1311 = vmatmul.mubr.f32.gmra.mrb[0].mxu0 %v1202
        %v1312 = vpop.f32.mrb[0].mxu0
        %v1313 = vadd.f32 0.0, %v1312
        %v1314 = vpop.f32.mrb[0].mxu0
        %1315 = vmatprep.mubr.f32.mxu0 0.0
        %1316 = vmatmul.mubr.f32.gmra.mrb[0].mxu0 %v1203
        %v1317 = vpop.f32.mrb[0].mxu0
        %v1318 = vadd.f32 0.0, %v1317
        %v1319 = vpop.f32.mrb[0].mxu0
        %1320 = vmatprep.mubr.f32.mxu0 0.0
        %1321 = vmatmul.mubr.f32.gmra.mrb[0].mxu0 %v1204
        %v1322 = vpop.f32.mrb[0].mxu0
        %v1323 = vadd.f32 0.0, %v1322
        %v1324 = vpop.f32.mrb[0].mxu0
        %1325 = vmatprep.mubr.f32.mxu0 0.0
        %1326 = vmatmul.mubr.f32.gmra.mrb[0].mxu0 %v1205
        %v1327 = vpop.f32.mrb[0].mxu0
        %v1328 = vadd.f32 0.0, %v1327
        %v1329 = vpop.f32.mrb[0].mxu0
        %1330 = vmatprep.mubr.f32.mxu0 0.0
        %1331 = vmatmul.mubr.f32.gmra.mrb[0].mxu0 %v1206
        %v1332 = vpop.f32.mrb[0].mxu0
        %v1333 = vadd.f32 0.0, %v1332
        %v1334 = vpop.f32.mrb[0].mxu0
        %1335 = vmatprep.mubr.f32.mxu0 0.0
        %1336 = vmatmul.mubr.f32.gmra.mrb[0].mxu0 %v1207
        %v1337 = vpop.f32.mrb[0].mxu0
        %v1338 = vadd.f32 0.0, %v1337
        %v1339 = vpop.f32.mrb[0].mxu0
        %1340 = vmatprep.mubr.f32.mxu0 0.0
        %1341 = vmatmul.mubr.f32.gmra.mrb[0].mxu0 %v1208
        %v1342 = vpop.f32.mrb[0].mxu0
        %v1343 = vadd.f32 0.0, %v1342
        %v1344 = vpop.f32.mrb[0].mxu0
        %1345 = vmatprep.mubr.f32.mxu0 0.0
        %1346 = vmatmul.mubr.f32.gmra.mrb[0].mxu0 %v1209
        %v1347 = vpop.f32.mrb[0].mxu0
        %v1348 = vadd.f32 0.0, %v1347
        %v1349 = vpop.f32.mrb[0].mxu0
        %1350 = vmatprep.mubr.f32.mxu0 0.0
        %1351 = vmatmul.mubr.f32.gmra.mrb[0].mxu0 %v1210
        %v1352 = vpop.f32.mrb[0].mxu0
        %v1353 = vadd.f32 0.0, %v1352
        %v1354 = vpop.f32.mrb[0].mxu0
        %1355 = vmatprep.mubr.f32.mxu0 0.0
        %1356 = vmatmul.mubr.f32.gmra.mrb[0].mxu0 %v1211
        %v1357 = vpop.f32.mrb[0].mxu0
        %v1358 = vadd.f32 0.0, %v1357
        %v1359 = vpop.f32.mrb[0].mxu0
        %1360 = vmatprep.mubr.f32.mxu0 0.0
        %1361 = vmatmul.mubr.f32.gmra.mrb[0].mxu0 %v1212
        %v1362 = vpop.f32.mrb[0].mxu0
        %v1363 = vadd.f32 0.0, %v1362
        %v1364 = vpop.f32.mrb[0].mxu0
        %1365 = vmatprep.mubr.f32.mxu0 0.0
        %1366 = vmatmul.mubr.f32.gmra.mrb[0].mxu0 %v1213
        %v1367 = vpop.f32.mrb[0].mxu0
        %v1368 = vadd.f32 0.0, %v1367
        %v1369 = vpop.f32.mrb[0].mxu0
        %1370 = vmatprep.mubr.f32.mxu0 0.0
        %1371 = vmatmul.mubr.f32.gmra.mrb[0].mxu0 %v1214
        %v1372 = vpop.f32.mrb[0].mxu0
        %v1373 = vadd.f32 0.0, %v1372
        %v1374 = vpop.f32.mrb[0].mxu0
        %1375 = vdwg.mxu0
        %1376 = vst [vmem:[%s326] sm:$0xff] %v1298
        %1377 = vst [vmem:[%s326 + $0x8] sm:$0xff] %v1303
        %1378 = vst [vmem:[%s326 + $0x10] sm:$0xff] %v1308
        %1379 = vst [vmem:[%s326 + $0x18] sm:$0xff] %v1313
        %1380 = vst [vmem:[%s326 + $0x20] sm:$0xff] %v1318
        %1381 = vst [vmem:[%s326 + $0x28] sm:$0xff] %v1323
        %1382 = vst [vmem:[%s326 + $0x30] sm:$0xff] %v1328
        %1383 = vst [vmem:[%s326 + $0x38] sm:$0xff] %v1333
        %1384 = vst [vmem:[%s326 + $0x40] sm:$0xff] %v1338
        %1385 = vst [vmem:[%s326 + $0x48] sm:$0xff] %v1343
        %1386 = vst [vmem:[%s326 + $0x50] sm:$0xff] %v1348
        %1387 = vst [vmem:[%s326 + $0x58] sm:$0xff] %v1353
        %1388 = vst [vmem:[%s326 + $0x60] sm:$0xff] %v1358
        %1389 = vst [vmem:[%s326 + $0x68] sm:$0xff] %v1363
        %1390 = vst [vmem:[%s326 + $0x70] sm:$0xff] %v1368
        %1391 = vst [vmem:[%s326 + $0x78] sm:$0xff] %v1373
        %s1392 = sand.u32 %s225, 1
        %s1393 = scalar_lea.sflag [#allocation3], %s1392
        %s1394 = sand.u32 %s225, 1
        %s1395 = smul.addr %s1394, 128
        %s1396 = scalar_lea.vmem [#allocation2], %s1395
        // Predicated region
        $region57: #{tpu_custom_call.1} parent=55 // pred_check
          %p1397 = pneg %p235
        $region58: #{tpu_custom_call.1} parent=55 // pred_check_branch
          %1399 = sbr.rel (%p1397) target = $region60
        $region59: #{tpu_custom_call.1} parent=55 // pred_region
          %s1400 = smul.u32 16, %s23
          %s1402 = ssub.s32 2048, 2048
          %1403 = vsyncadd %s1393, %s1402
          %s1404 = smul.addr %s1400, 128
          %s1405 = scalar_lea.hbm %s9, %s1404
          %s1406 = sshll.u32 %s1396, 4
          %s1407 = int_to_ptr.vmem [resolvable:$true] %s1406
          %1412 = dma.vmem_to_hbm [thread:$0]  %s1407, 2048, %s1405, %s1393, 128, 128, 8
        $region60: #{tpu_custom_call.1} parent=55 // pred_fallthru
          _
      $region56: #{tpu_custom_call.1} parent=5 // pred_fallthru
        _
      %p1413 = scmp.le.s32.totalorder 2, %s18
      // Predicated region
      $region61: #{tpu_custom_call.1} parent=5 // pred_check
        %p1414 = pneg %p1413
      $region62: #{tpu_custom_call.1} parent=5 // pred_check_branch
        %1416 = sbr.rel (%p1414) target = $region64
      $region63: #{tpu_custom_call.1} parent=5 // pred_region
        %s1417 = ssub.s32 %s18, 2
        // Predicated region
        $region65: #{tpu_custom_call.1} parent=63 // pred_check
          %p1418 = pneg %p241
        $region66: #{tpu_custom_call.1} parent=63 // pred_check_branch
          %1420 = sbr.rel (%p1418) target = $region68
        $region67: #{tpu_custom_call.1} parent=63 // pred_region
          %s1421 = sand.u32 %s226, 1
          %s1422 = scalar_lea.sflag [#allocation3], %s1421
          %s1423 = sand.u32 %s226, 1
          %s1424 = smul.addr %s1423, 128
          %s1425 = scalar_lea.vmem [#allocation2], %s1424
          %1426 = dma.done %s1422, 2048
        $region68: #{tpu_custom_call.1} parent=63 // pred_fallthru
          _
      $region64: #{tpu_custom_call.1} parent=5 // pred_fallthru
        _
    $region6: #{tpu_custom_call.1} parent=1 // loop_footer
      %s22 = sadd.s32 1, %s18
    $region7: #{tpu_custom_call.1} parent=1 // loop_footer_branch
      %17 = sbr.rel target = $region3
    $region8: #{tpu_custom_call.1} parent=1 // loop_exit
      _
    %1427 = vsyncpa [#allocation3], 1
    %s1428 = scalar_lea.sflag [#allocation3], 1
    %1429 = vsyncpa %s1428, 1

</llo_original>
